<compile_context>
chip_gen: v6e
topology: v6e:2x2x1
jax: 0.10.0
libtpu: 0.0.40
codegen_flags: <defaults>
</compile_context>

<pallas_src>
import jax
import jax.numpy as jnp
from jax import lax
from jax.experimental import pallas as pl
from jax.experimental.pallas import tpu as pltpu

EPS = 1e-5


def _fused_projection_kernel(x_ref, w1_ref, g1_ref, be1_ref,
                             w2_ref, g2_ref, be2_ref, o_ref):
    """One output-feature tile of: BN(ReLU(BN(x@w1)) @ w2_tile)."""
    # ---- layer 1: Linear -> BatchNorm1d (training mode) -> ReLU -------------
    x = x_ref[...].astype(jnp.bfloat16)                   # in-kernel cast (VPU, free)
    h = jnp.dot(x, w1_ref[...], preferred_element_type=jnp.float32)
    mu1 = jnp.mean(h, axis=0, keepdims=True)
    var1 = jnp.mean(h * h, axis=0, keepdims=True) - mu1 * mu1   # one-pass variance
    scale1 = g1_ref[...] * lax.rsqrt(var1 + EPS)
    shift1 = be1_ref[...] - mu1 * scale1
    h = jnp.maximum(h * scale1 + shift1, 0.0).astype(jnp.bfloat16)

    # ---- layer 2: Linear -> BatchNorm1d, for this feature tile --------------
    y = jnp.dot(h, w2_ref[...], preferred_element_type=jnp.float32)
    mu2 = jnp.mean(y, axis=0, keepdims=True)
    var2 = jnp.mean(y * y, axis=0, keepdims=True) - mu2 * mu2
    scale2 = g2_ref[...] * lax.rsqrt(var2 + EPS)
    shift2 = be2_ref[...] - mu2 * scale2
    o_ref[...] = (y * scale2 + shift2).astype(o_ref.dtype)


def projection_mlp(x, params, *, tile_n2=256):
    """x: (B, in_dim) float32. Returns (B, out_dim) float32.

    Single fused pallas_call. Grid is a "parallel" axis over layer-2 output
    feature tiles only; layer 1 is recomputed per tile (tiny), keeping tiles
    fully independent so v7x can split them across its two TensorCores.
    """
    B, K1 = x.shape
    K1w, N1 = params["w1"].shape
    N1w, N2 = params["w2"].shape
    assert K1 == K1w and N1 == N1w
    tn2 = min(tile_n2, N2)
    assert N2 % tn2 == 0, "out_dim must tile evenly by tile_n2"

    return pl.pallas_call(
        _fused_projection_kernel,
        out_shape=jax.ShapeDtypeStruct((B, N2), jnp.float32),
        grid=(N2 // tn2,),
        in_specs=[
            pl.BlockSpec((B, K1), lambda j: (0, 0)),    # x, resident across grid
            pl.BlockSpec((K1, N1), lambda j: (0, 0)),   # w1, resident
            pl.BlockSpec((1, N1), lambda j: (0, 0)),    # BN1 gamma
            pl.BlockSpec((1, N1), lambda j: (0, 0)),    # BN1 beta
            pl.BlockSpec((N1, tn2), lambda j: (0, j)),  # w2 feature tile
            pl.BlockSpec((1, tn2), lambda j: (0, j)),   # BN2 gamma tile
            pl.BlockSpec((1, tn2), lambda j: (0, j)),   # BN2 beta tile
        ],
        out_specs=pl.BlockSpec((B, tn2), lambda j: (0, j)),
        compiler_params=pltpu.CompilerParams(
            dimension_semantics=("parallel",),
        ),
    )(x, params["w1"], params["g1"], params["be1"],
      params["w2"], params["g2"], params["be2"])


def init_params(key, in_dim, hidden_dim, out_dim):
    k1, k2, k3, k4 = jax.random.split(key, 4)
    lim1 = 1.0 / jnp.sqrt(in_dim)
    lim2 = 1.0 / jnp.sqrt(hidden_dim)
    w1 = jax.random.uniform(k1, (in_dim, hidden_dim), jnp.float32, -lim1, lim1)
    w2 = jax.random.uniform(k3, (hidden_dim, out_dim), jnp.float32, -lim2, lim2)
    return {
        # Matmul weights shipped as bf16 (MXU-native, half the HBM->VMEM bytes).
        "w1": w1.astype(jnp.bfloat16),
        "w2": w2.astype(jnp.bfloat16),
        # Linear biases: used only by the f32 reference. BN's batch-mean
        # subtraction cancels them exactly, so the kernel never loads them.
        "b1": jax.random.uniform(k2, (1, hidden_dim), jnp.float32, -lim1, lim1),
        "b2": jax.random.uniform(k4, (1, out_dim), jnp.float32, -lim2, lim2),
        # BatchNorm1d affine, PyTorch init: weight=1, bias=0.
        "g1": jnp.ones((1, hidden_dim), jnp.float32),
        "be1": jnp.zeros((1, hidden_dim), jnp.float32),
        "g2": jnp.ones((1, out_dim), jnp.float32),
        "be2": jnp.zeros((1, out_dim), jnp.float32),
    }


def _reference_kernel_math(x, p):
    """Mirrors the kernel's precision choices (bf16 operands, no pre-BN bias)."""
    def layer(xx, w, g, be, relu):
        h = jnp.dot(xx.astype(jnp.bfloat16), w, preferred_element_type=jnp.float32)
        mu = h.mean(0, keepdims=True)
        var = (h * h).mean(0, keepdims=True) - mu * mu
        scale = g * lax.rsqrt(var + EPS)
        y = h * scale + (be - mu * scale)
        if relu:
            y = jnp.maximum(y, 0.0)
        return y

    h = layer(x, p["w1"], p["g1"], p["be1"], True).astype(jnp.bfloat16)
    return layer(h, p["w2"], p["g2"], p["be2"], False)


def _reference_f32(x, p):
    """Full-f32 PyTorch-equivalent forward, Linear biases included."""
    h = x @ p["w1"].astype(jnp.float32) + p["b1"]
    mu = h.mean(0, keepdims=True)
    var = ((h - mu) ** 2).mean(0, keepdims=True)
    h = jnp.maximum((h - mu) * lax.rsqrt(var + EPS) * p["g1"] + p["be1"], 0.0)
    y = h @ p["w2"].astype(jnp.float32) + p["b2"]
    mu = y.mean(0, keepdims=True)
    var = ((y - mu) ** 2).mean(0, keepdims=True)
    return (y - mu) * lax.rsqrt(var + EPS) * p["g2"] + p["be2"]


if __name__ == "__main__":
    # Module defaults for feature dims (in=128, hidden=512, out=512, lane-dense);
    # small sublane-aligned batch.
    B, IN_DIM, HIDDEN, OUT_DIM = 64, 128, 512, 512

    key = jax.random.PRNGKey(0)
    kx, kp = jax.random.split(key)
    x = jax.random.normal(kx, (B, IN_DIM), jnp.float32)
    params = init_params(kp, IN_DIM, HIDDEN, OUT_DIM)

    out = jax.block_until_ready(projection_mlp(x, params))
    assert out.shape == (B, OUT_DIM) and out.dtype == jnp.float32

    # (1) Tight check vs a reference with identical precision choices.
    ref_tight = _reference_kernel_math(x, params)
    assert jnp.allclose(out, ref_tight, atol=2e-3, rtol=2e-3), \
        "mismatch vs kernel-math reference"

    # (2) Semantic check vs full-f32 forward WITH Linear biases (which BN's
    #     mean subtraction cancels); loose tolerance accounts for bf16 matmuls.
    ref_full = _reference_f32(x, params)
    rel_err = jnp.linalg.norm(out - ref_full) / jnp.linalg.norm(ref_full)
    assert float(rel_err) < 3e-2, f"relative error vs f32 reference too high: {rel_err}"

    print("KERNEL_OK")
</pallas_src>

<mosaic_0001>
module attributes {stable_mosaic.version = 11 : i64} {
  func.func @_fused_projection_kernel(%arg0: i32, %arg1: memref<64x128xf32, #tpu.memory_space<vmem>>, %arg2: memref<128x512xbf16, #tpu.memory_space<vmem>>, %arg3: memref<1x512xf32, #tpu.memory_space<vmem>>, %arg4: memref<1x512xf32, #tpu.memory_space<vmem>>, %arg5: memref<512x256xbf16, #tpu.memory_space<vmem>>, %arg6: memref<1x256xf32, #tpu.memory_space<vmem>>, %arg7: memref<1x256xf32, #tpu.memory_space<vmem>>, %arg8: memref<64x256xf32, #tpu.memory_space<vmem>>) attributes {dimension_semantics = [#tpu.dimension_semantics<parallel>], iteration_bounds = array<i64: 2>, scalar_prefetch = 0 : i64, scratch_operands = 0 : i64, tpu.core_type = #tpu.core_type<tc>, window_params = [{pipeline_mode = #tpu.pipeline_mode<synchronous>, transform_indices = @transform_0, window_bounds = array<i64: 64, 128>}, {pipeline_mode = #tpu.pipeline_mode<synchronous>, transform_indices = @transform_1, window_bounds = array<i64: 128, 512>}, {pipeline_mode = #tpu.pipeline_mode<synchronous>, transform_indices = @transform_2, window_bounds = array<i64: 1, 512>}, {pipeline_mode = #tpu.pipeline_mode<synchronous>, transform_indices = @transform_3, window_bounds = array<i64: 1, 512>}, {transform_indices = @transform_4, window_bounds = array<i64: 512, 256>}, {transform_indices = @transform_5, window_bounds = array<i64: 1, 256>}, {transform_indices = @transform_6, window_bounds = array<i64: 1, 256>}, {transform_indices = @transform_7, window_bounds = array<i64: 64, 256>}]} {
    %c0 = arith.constant 0 : index
    %c0_0 = arith.constant 0 : index
    %0 = vector.load %arg1[%c0, %c0_0] : memref<64x128xf32, #tpu.memory_space<vmem>>, vector<64x128xf32>
    %1 = arith.truncf %0 : vector<64x128xf32> to vector<64x128xbf16>
    %c0_1 = arith.constant 0 : index
    %c0_2 = arith.constant 0 : index
    %2 = vector.load %arg2[%c0_1, %c0_2] : memref<128x512xbf16, #tpu.memory_space<vmem>>, vector<128x512xbf16>
    %cst = arith.constant dense<0.000000e+00> : vector<64x512xf32>
    %3 = tpu.matmul %1, %2, %cst {dimension_numbers = #tpu.dot_dimension_numbers<[1], [0], [0], [1], [0, 0, 1, 1], [], []>} : vector<64x128xbf16>, vector<128x512xbf16>, vector<64x512xf32> -> vector<64x512xf32>
    %cst_3 = arith.constant dense<0.000000e+00> : vector<512xf32>
    %4 = vector.multi_reduction <add>, %3, %cst_3 [0] : vector<64x512xf32> to vector<512xf32>
    %5 = vector.shape_cast %4 : vector<512xf32> to vector<1x512xf32>
    %cst_4 = arith.constant 6.400000e+01 : f32
    %6 = vector.broadcast %cst_4 : f32 to vector<1x512xf32>
    %7 = arith.divf %5, %6 : vector<1x512xf32>
    %8 = arith.mulf %3, %3 : vector<64x512xf32>
    %cst_5 = arith.constant dense<0.000000e+00> : vector<512xf32>
    %9 = vector.multi_reduction <add>, %8, %cst_5 [0] : vector<64x512xf32> to vector<512xf32>
    %10 = vector.shape_cast %9 : vector<512xf32> to vector<1x512xf32>
    %cst_6 = arith.constant 6.400000e+01 : f32
    %11 = vector.broadcast %cst_6 : f32 to vector<1x512xf32>
    %12 = arith.divf %10, %11 : vector<1x512xf32>
    %13 = arith.mulf %7, %7 : vector<1x512xf32>
    %14 = arith.subf %12, %13 : vector<1x512xf32>
    %c0_7 = arith.constant 0 : index
    %c0_8 = arith.constant 0 : index
    %15 = vector.load %arg3[%c0_7, %c0_8] : memref<1x512xf32, #tpu.memory_space<vmem>>, vector<1x512xf32>
    %cst_9 = arith.constant 9.99999974E-6 : f32
    %16 = vector.broadcast %cst_9 : f32 to vector<1x512xf32>
    %17 = arith.addf %14, %16 : vector<1x512xf32>
    %18 = math.rsqrt %17 : vector<1x512xf32>
    %19 = arith.mulf %15, %18 : vector<1x512xf32>
    %c0_10 = arith.constant 0 : index
    %c0_11 = arith.constant 0 : index
    %20 = vector.load %arg4[%c0_10, %c0_11] : memref<1x512xf32, #tpu.memory_space<vmem>>, vector<1x512xf32>
    %21 = arith.mulf %7, %19 : vector<1x512xf32>
    %22 = arith.subf %20, %21 : vector<1x512xf32>
    %23 = vector.broadcast %19 : vector<1x512xf32> to vector<64x512xf32>
    %24 = arith.mulf %3, %23 : vector<64x512xf32>
    %25 = vector.broadcast %22 : vector<1x512xf32> to vector<64x512xf32>
    %26 = arith.addf %24, %25 : vector<64x512xf32>
    %cst_12 = arith.constant 0.000000e+00 : f32
    %27 = vector.broadcast %cst_12 : f32 to vector<64x512xf32>
    %28 = arith.maximumf %26, %27 : vector<64x512xf32>
    %29 = arith.truncf %28 : vector<64x512xf32> to vector<64x512xbf16>
    %c0_13 = arith.constant 0 : index
    %c0_14 = arith.constant 0 : index
    %30 = vector.load %arg5[%c0_13, %c0_14] : memref<512x256xbf16, #tpu.memory_space<vmem>>, vector<512x256xbf16>
    %cst_15 = arith.constant dense<0.000000e+00> : vector<64x256xf32>
    %31 = tpu.matmul %29, %30, %cst_15 {dimension_numbers = #tpu.dot_dimension_numbers<[1], [0], [0], [1], [0, 0, 1, 1], [], []>} : vector<64x512xbf16>, vector<512x256xbf16>, vector<64x256xf32> -> vector<64x256xf32>
    %cst_16 = arith.constant dense<0.000000e+00> : vector<256xf32>
    %32 = vector.multi_reduction <add>, %31, %cst_16 [0] : vector<64x256xf32> to vector<256xf32>
    %33 = vector.shape_cast %32 : vector<256xf32> to vector<1x256xf32>
    %cst_17 = arith.constant 6.400000e+01 : f32
    %34 = vector.broadcast %cst_17 : f32 to vector<1x256xf32>
    %35 = arith.divf %33, %34 : vector<1x256xf32>
    %36 = arith.mulf %31, %31 : vector<64x256xf32>
    %cst_18 = arith.constant dense<0.000000e+00> : vector<256xf32>
    %37 = vector.multi_reduction <add>, %36, %cst_18 [0] : vector<64x256xf32> to vector<256xf32>
    %38 = vector.shape_cast %37 : vector<256xf32> to vector<1x256xf32>
    %cst_19 = arith.constant 6.400000e+01 : f32
    %39 = vector.broadcast %cst_19 : f32 to vector<1x256xf32>
    %40 = arith.divf %38, %39 : vector<1x256xf32>
    %41 = arith.mulf %35, %35 : vector<1x256xf32>
    %42 = arith.subf %40, %41 : vector<1x256xf32>
    %c0_20 = arith.constant 0 : index
    %c0_21 = arith.constant 0 : index
    %43 = vector.load %arg6[%c0_20, %c0_21] : memref<1x256xf32, #tpu.memory_space<vmem>>, vector<1x256xf32>
    %cst_22 = arith.constant 9.99999974E-6 : f32
    %44 = vector.broadcast %cst_22 : f32 to vector<1x256xf32>
    %45 = arith.addf %42, %44 : vector<1x256xf32>
    %46 = math.rsqrt %45 : vector<1x256xf32>
    %47 = arith.mulf %43, %46 : vector<1x256xf32>
    %c0_23 = arith.constant 0 : index
    %c0_24 = arith.constant 0 : index
    %48 = vector.load %arg7[%c0_23, %c0_24] : memref<1x256xf32, #tpu.memory_space<vmem>>, vector<1x256xf32>
    %49 = arith.mulf %35, %47 : vector<1x256xf32>
    %50 = arith.subf %48, %49 : vector<1x256xf32>
    %51 = vector.broadcast %47 : vector<1x256xf32> to vector<64x256xf32>
    %52 = arith.mulf %31, %51 : vector<64x256xf32>
    %53 = vector.broadcast %50 : vector<1x256xf32> to vector<64x256xf32>
    %54 = arith.addf %52, %53 : vector<64x256xf32>
    %c0_25 = arith.constant 0 : index
    %c0_26 = arith.constant 0 : index
    %55 = vector.load %arg8[%c0_25, %c0_26] : memref<64x256xf32, #tpu.memory_space<vmem>>, vector<64x256xf32>
    tpu.vector_store %arg8[%c0_25, %c0_26], %54 {strides = array<i32>} : memref<64x256xf32, #tpu.memory_space<vmem>>, vector<64x256xf32>,
    return
  }
  func.func @transform_0(%arg0: i32) -> (i32, i32) {
    %c0_i32 = arith.constant 0 : i32
    %c0_i32_0 = arith.constant 0 : i32
    %c0_i32_1 = arith.constant 0 : i32
    return %c0_i32, %c0_i32_0 : i32, i32
  }
  func.func @transform_1(%arg0: i32) -> (i32, i32) {
    %c0_i32 = arith.constant 0 : i32
    %c0_i32_0 = arith.constant 0 : i32
    %c0_i32_1 = arith.constant 0 : i32
    return %c0_i32, %c0_i32_0 : i32, i32
  }
  func.func @transform_2(%arg0: i32) -> (i32, i32) {
    %c0_i32 = arith.constant 0 : i32
    %c0_i32_0 = arith.constant 0 : i32
    %c0_i32_1 = arith.constant 0 : i32
    return %c0_i32, %c0_i32_0 : i32, i32
  }
  func.func @transform_3(%arg0: i32) -> (i32, i32) {
    %c0_i32 = arith.constant 0 : i32
    %c0_i32_0 = arith.constant 0 : i32
    %c0_i32_1 = arith.constant 0 : i32
    return %c0_i32, %c0_i32_0 : i32, i32
  }
  func.func @transform_4(%arg0: i32) -> (i32, i32) {
    %c0_i32 = arith.constant 0 : i32
    %c0_i32_0 = arith.constant 0 : i32
    return %c0_i32, %arg0 : i32, i32
  }
  func.func @transform_5(%arg0: i32) -> (i32, i32) {
    %c0_i32 = arith.constant 0 : i32
    %c0_i32_0 = arith.constant 0 : i32
    return %c0_i32, %arg0 : i32, i32
  }
  func.func @transform_6(%arg0: i32) -> (i32, i32) {
    %c0_i32 = arith.constant 0 : i32
    %c0_i32_0 = arith.constant 0 : i32
    return %c0_i32, %arg0 : i32, i32
  }
  func.func @transform_7(%arg0: i32) -> (i32, i32) {
    %c0_i32 = arith.constant 0 : i32
    %c0_i32_0 = arith.constant 0 : i32
    return %c0_i32, %arg0 : i32, i32
  }
}

</mosaic_0001>

<llo_original>
// kernel: tpu_custom_call.1
$region0: #{tpu_custom_call.1}
  #allocation0 [shape = 'u32[]', space=smem, size = 0x4, offset = 0x4, fixed_abs, tag = 'smem constant byte address 0x4 - core index']
  #allocation1 [shape = 'u32[144,128]{1,0:T(1,128)}', space=vmem, size = 0x12000, scoped, tag = 'internal scratch']
  %s0 = inlined_call_operand.hbm [shape: f32[64,128], index: 0, kind: input, shape index: {}]
  %s1 = inlined_call_operand.hbm [shape: bf16[128,512], index: 1, kind: input, shape index: {}]
  %s2 = inlined_call_operand.hbm [shape: f32[1,512], index: 2, kind: input, shape index: {}]
  %s3 = inlined_call_operand.vmem [shape: f32[1,512], index: 3, kind: input, shape index: {}]
  %s4 = inlined_call_operand.hbm [shape: bf16[512,512], index: 4, kind: input, shape index: {}]
  %s5 = inlined_call_operand.vmem [shape: f32[1,512], index: 5, kind: input, shape index: {}]
  %s6 = inlined_call_operand.hbm [shape: f32[1,512], index: 6, kind: input, shape index: {}]
  %s7 = inlined_call_operand.hbm [shape: f32[64,512], index: 7, kind: output, shape index: {}]
  %s8 = sld [smem:[#allocation0]]
  $region81: #{tpu_custom_call.1} parent=0
    _
  %s10 = ssub.s32 1, %s8
  %s11 = scalar_select 0, %s10, %s8
  $region1: #{tpu_custom_call.1} parent=0
    #allocation2 [shape = 'u8[32768]{0}', space=vmem, size = 0x8000, scoped, tag = 'input window, operand 0, single buffered']
    #allocation3 [shape = 's32[2]{0}', space=sflag, size = 0x8, scoped, tag = 'scoped memory for tpu_custom_call.1']
    #allocation4 [shape = 's32[2]{0}', space=sflag, size = 0x8, scoped, tag = 'scoped memory for tpu_custom_call.1']
    #allocation5 [shape = 'u8[131072]{0}', space=vmem, size = 0x20000, scoped, tag = 'input window, operand 1, single buffered']
    #allocation6 [shape = 's32[1]{0}', space=sflag, size = 0x4, scoped, tag = 'scoped memory for tpu_custom_call.1']
    #allocation7 [shape = 'u8[2048]{0}', space=vmem, size = 0x800, scoped, tag = 'input window, operand 2, single buffered']
    #allocation8 [shape = 'u8[524288]{0}', space=vmem, size = 0x80000, scoped, tag = 'input window, operand 4']
    #allocation9 [shape = 's32[2]{0}', space=sflag, size = 0x8, scoped, tag = 'scoped memory for tpu_custom_call.1']
    #allocation10 [shape = 'u8[2048]{0}', space=vmem, size = 0x800, scoped, tag = 'input window, operand 6']
    #allocation11 [shape = 'u8[131072]{0}', space=vmem, size = 0x20000, scoped, tag = 'output window, operand 0']
    %12 = vsyncpa [#allocation3], 0
    %13 = vsyncpa [#allocation6], 0
    %14 = vsyncpa [#allocation9], 0
    %s15 = scalar_lea.sflag [#allocation9], 1
    %16 = vsyncpa %s15, 0
    %17 = vsyncpa [#allocation4], 0
    %s18 = scalar_lea.sflag [#allocation4], 1
    %19 = vsyncpa %s18, 0
    loop: start=0, step=1, limit=4
    $region2: #{tpu_custom_call.1} parent=1 // loop_pre_header
      _
    $region3: #{tpu_custom_call.1} parent=1 // loop_header
      %s21 = sphi 0, %s25
      %p22 = scmp.ge.s32.totalorder %s21, 4
      %s29 = sphi 0, %s29
      %s31 = sphi 0, %s29
      %s32 = sphi 0, %s31
      %s46 = sphi 0, %s32
      %s50 = sphi 0, %s50
      %s52 = sphi 0, %s50
      %s53 = sphi 0, %s52
      %s67 = sphi 0, %s53
      %s71 = sphi 0, %s71
      %s73 = sphi 0, %s71
      %s74 = sphi 0, %s73
      %s88 = sphi 0, %s74
      %s92 = sphi 0, %s92
      %s94 = sphi 0, %s92
      %s95 = sphi 0, %s94
      %s109 = sphi 0, %s95
      %s115 = sphi 0, %s117
      %s118 = sphi 0, %s115
      %s119 = sphi 0, %s118
      %s135 = sphi 0, %s119
      %s141 = sphi 0, %s143
      %s144 = sphi 0, %s141
      %s145 = sphi 0, %s144
      %s161 = sphi 0, %s145
      %s167 = sphi 0, %s169
      %s170 = sphi 0, %s167
      %s171 = sphi 0, %s170
      %s187 = sphi 0, %s171
      %s193 = sphi 0, %s195
      %s196 = sphi 0, %s193
      %s197 = sphi 0, %s196
      %s213 = sphi 0, %s197
    $region4: #{tpu_custom_call.1} parent=1 // loop_header_branch
      %24 = sbr.rel (%p22) target = $region8
    $region5: #{tpu_custom_call.1} parent=1 // loop_body
      %s26 = ssub.s32 %s21, 1
      %s27 = ssub.s32 %s21, 2
      %s28 = sadd.s32 %s21, 1
      %s30 = sadd.s32 %s29, 1
      %p33 = scmp.eq.s32.totalorder %s21, 1
      %p34 = scmp.ne.s32.totalorder %s29, %s31
      %p35 = scmp.eq.s32.totalorder %s21, 0
      %p36 = por %p34, %p35
      %p37 = scmp.ne.s32.totalorder %s29, %s31
      %p38 = scmp.eq.s32.totalorder %s26, 1
      %p39 = por %p37, %p38
      %p40 = scmp.ne.s32.totalorder %s31, %s32
      %p41 = scmp.eq.s32.totalorder %s26, 0
      %p42 = por %p40, %p41
      %p43 = scmp.ne.s32.totalorder %s31, %s32
      %p44 = scmp.eq.s32.totalorder %s27, 1
      %p45 = por %p43, %p44
      %p47 = scmp.ne.s32.totalorder %s32, %s46
      %p48 = scmp.eq.s32.totalorder %s27, 0
      %p49 = por %p47, %p48
      %s51 = sadd.s32 %s50, 1
      %p54 = scmp.eq.s32.totalorder %s21, 1
      %p55 = scmp.ne.s32.totalorder %s50, %s52
      %p56 = scmp.eq.s32.totalorder %s21, 0
      %p57 = por %p55, %p56
      %p58 = scmp.ne.s32.totalorder %s50, %s52
      %p59 = scmp.eq.s32.totalorder %s26, 1
      %p60 = por %p58, %p59
      %p61 = scmp.ne.s32.totalorder %s52, %s53
      %p62 = scmp.eq.s32.totalorder %s26, 0
      %p63 = por %p61, %p62
      %p64 = scmp.ne.s32.totalorder %s52, %s53
      %p65 = scmp.eq.s32.totalorder %s27, 1
      %p66 = por %p64, %p65
      %p68 = scmp.ne.s32.totalorder %s53, %s67
      %p69 = scmp.eq.s32.totalorder %s27, 0
      %p70 = por %p68, %p69
      %s72 = sadd.s32 %s71, 1
      %p75 = scmp.eq.s32.totalorder %s21, 1
      %p76 = scmp.ne.s32.totalorder %s71, %s73
      %p77 = scmp.eq.s32.totalorder %s21, 0
      %p78 = por %p76, %p77
      %p79 = scmp.ne.s32.totalorder %s71, %s73
      %p80 = scmp.eq.s32.totalorder %s26, 1
      %p81 = por %p79, %p80
      %p82 = scmp.ne.s32.totalorder %s73, %s74
      %p83 = scmp.eq.s32.totalorder %s26, 0
      %p84 = por %p82, %p83
      %p85 = scmp.ne.s32.totalorder %s73, %s74
      %p86 = scmp.eq.s32.totalorder %s27, 1
      %p87 = por %p85, %p86
      %p89 = scmp.ne.s32.totalorder %s74, %s88
      %p90 = scmp.eq.s32.totalorder %s27, 0
      %p91 = por %p89, %p90
      %s93 = sadd.s32 %s92, 1
      %p96 = scmp.eq.s32.totalorder %s21, 1
      %p97 = scmp.ne.s32.totalorder %s92, %s94
      %p98 = scmp.eq.s32.totalorder %s21, 0
      %p99 = por %p97, %p98
      %p100 = scmp.ne.s32.totalorder %s92, %s94
      %p101 = scmp.eq.s32.totalorder %s26, 1
      %p102 = por %p100, %p101
      %p103 = scmp.ne.s32.totalorder %s94, %s95
      %p104 = scmp.eq.s32.totalorder %s26, 0
      %p105 = por %p103, %p104
      %p106 = scmp.ne.s32.totalorder %s94, %s95
      %p107 = scmp.eq.s32.totalorder %s27, 1
      %p108 = por %p106, %p107
      %p110 = scmp.ne.s32.totalorder %s95, %s109
      %p111 = scmp.eq.s32.totalorder %s27, 0
      %p112 = por %p110, %p111
      %s113 = ssub.s32 %s21, %s28
      %p114 = scmp.eq.s32.totalorder %s113, 0
      %s116 = sadd.s32 %s115, 1
      %s117 = scalar_select %p114, %s115, %s116
      %p120 = pneg %p114
      %p121 = scmp.eq.s32.totalorder %s21, 1
      %p122 = por %p120, %p121
      %p123 = scmp.ne.s32.totalorder %s115, %s118
      %p124 = scmp.eq.s32.totalorder %s21, 0
      %p125 = por %p123, %p124
      %p126 = scmp.ne.s32.totalorder %s115, %s118
      %p127 = scmp.eq.s32.totalorder %s26, 1
      %p128 = por %p126, %p127
      %p129 = scmp.ne.s32.totalorder %s118, %s119
      %p130 = scmp.eq.s32.totalorder %s26, 0
      %p131 = por %p129, %p130
      %p132 = scmp.ne.s32.totalorder %s118, %s119
      %p133 = scmp.eq.s32.totalorder %s27, 1
      %p134 = por %p132, %p133
      %p136 = scmp.ne.s32.totalorder %s119, %s135
      %p137 = scmp.eq.s32.totalorder %s27, 0
      %p138 = por %p136, %p137
      %s139 = ssub.s32 %s21, %s28
      %p140 = scmp.eq.s32.totalorder %s139, 0
      %s142 = sadd.s32 %s141, 1
      %s143 = scalar_select %p140, %s141, %s142
      %p146 = pneg %p140
      %p147 = scmp.eq.s32.totalorder %s21, 1
      %p148 = por %p146, %p147
      %p149 = scmp.ne.s32.totalorder %s141, %s144
      %p150 = scmp.eq.s32.totalorder %s21, 0
      %p151 = por %p149, %p150
      %p152 = scmp.ne.s32.totalorder %s141, %s144
      %p153 = scmp.eq.s32.totalorder %s26, 1
      %p154 = por %p152, %p153
      %p155 = scmp.ne.s32.totalorder %s144, %s145
      %p156 = scmp.eq.s32.totalorder %s26, 0
      %p157 = por %p155, %p156
      %p158 = scmp.ne.s32.totalorder %s144, %s145
      %p159 = scmp.eq.s32.totalorder %s27, 1
      %p160 = por %p158, %p159
      %p162 = scmp.ne.s32.totalorder %s145, %s161
      %p163 = scmp.eq.s32.totalorder %s27, 0
      %p164 = por %p162, %p163
      %s165 = ssub.s32 %s21, %s28
      %p166 = scmp.eq.s32.totalorder %s165, 0
      %s168 = sadd.s32 %s167, 1
      %s169 = scalar_select %p166, %s167, %s168
      %p172 = pneg %p166
      %p173 = scmp.eq.s32.totalorder %s21, 1
      %p174 = por %p172, %p173
      %p175 = scmp.ne.s32.totalorder %s167, %s170
      %p176 = scmp.eq.s32.totalorder %s21, 0
      %p177 = por %p175, %p176
      %p178 = scmp.ne.s32.totalorder %s167, %s170
      %p179 = scmp.eq.s32.totalorder %s26, 1
      %p180 = por %p178, %p179
      %p181 = scmp.ne.s32.totalorder %s170, %s171
      %p182 = scmp.eq.s32.totalorder %s26, 0
      %p183 = por %p181, %p182
      %p184 = scmp.ne.s32.totalorder %s170, %s171
      %p185 = scmp.eq.s32.totalorder %s27, 1
      %p186 = por %p184, %p185
      %p188 = scmp.ne.s32.totalorder %s171, %s187
      %p189 = scmp.eq.s32.totalorder %s27, 0
      %p190 = por %p188, %p189
      %s191 = ssub.s32 %s21, %s28
      %p192 = scmp.eq.s32.totalorder %s191, 0
      %s194 = sadd.s32 %s193, 1
      %s195 = scalar_select %p192, %s193, %s194
      %p198 = pneg %p192
      %p199 = scmp.eq.s32.totalorder %s21, 1
      %p200 = por %p198, %p199
      %p201 = scmp.ne.s32.totalorder %s193, %s196
      %p202 = scmp.eq.s32.totalorder %s21, 0
      %p203 = por %p201, %p202
      %p204 = scmp.ne.s32.totalorder %s193, %s196
      %p205 = scmp.eq.s32.totalorder %s26, 1
      %p206 = por %p204, %p205
      %p207 = scmp.ne.s32.totalorder %s196, %s197
      %p208 = scmp.eq.s32.totalorder %s26, 0
      %p209 = por %p207, %p208
      %p210 = scmp.ne.s32.totalorder %s196, %s197
      %p211 = scmp.eq.s32.totalorder %s27, 1
      %p212 = por %p210, %p211
      %p214 = scmp.ne.s32.totalorder %s197, %s213
      %p215 = scmp.eq.s32.totalorder %s27, 0
      %p216 = por %p214, %p215
      %p217 = scmp.le.s32.totalorder 1, %s21
      %p218 = scmp.lt.s32.totalorder %s21, 3
      %p219 = pnand %p217, %p218
      %p220 = pneg %p219
      // Predicated region
      $region9: #{tpu_custom_call.1} parent=5 // pred_check
        _
      $region10: #{tpu_custom_call.1} parent=5 // pred_check_branch
        %222 = sbr.rel (%p219) target = $region12
      $region11: #{tpu_custom_call.1} parent=5 // pred_region
        %s223 = ssub.s32 %s21, 1
        // Predicated region
        $region13: #{tpu_custom_call.1} parent=11 // pred_check
          %p224 = pneg %p42
        $region14: #{tpu_custom_call.1} parent=11 // pred_check_branch
          %226 = sbr.rel (%p224) target = $region16
        $region15: #{tpu_custom_call.1} parent=11 // pred_region
          %s228 = ssub.s32 1024, 1024
          %229 = vsyncadd [#allocation3], %s228
          %s230 = sshll.u32 [#allocation2], 4
          %s231 = int_to_ptr.vmem [resolvable:$true] %s230
          %236 = dma.hbm_to_vmem [thread:$0]  %s0, 1024, %s231, [#allocation3], 128, 128, 8
        $region16: #{tpu_custom_call.1} parent=11 // pred_fallthru
          _
        // Predicated region
        $region17: #{tpu_custom_call.1} parent=11 // pred_check
          %p237 = pneg %p63
        $region18: #{tpu_custom_call.1} parent=11 // pred_check_branch
          %239 = sbr.rel (%p237) target = $region20
        $region19: #{tpu_custom_call.1} parent=11 // pred_region
          %s241 = ssub.s32 4096, 4096
          %242 = vsyncadd [#allocation6], %s241
          %s243 = sshll.u32 [#allocation5], 4
          %s244 = int_to_ptr.vmem [resolvable:$true] %s243
          %249 = dma.hbm_to_vmem [thread:$0]  %s1, 4096, %s244, [#allocation6], 256, 256, 16
        $region20: #{tpu_custom_call.1} parent=11 // pred_fallthru
          _
        // Predicated region
        $region21: #{tpu_custom_call.1} parent=11 // pred_check
          %p250 = pneg %p84
        $region22: #{tpu_custom_call.1} parent=11 // pred_check_branch
          %252 = sbr.rel (%p250) target = $region24
        $region23: #{tpu_custom_call.1} parent=11 // pred_region
          %s254 = ssub.s32 64, 64
          %255 = vsyncadd [#allocation6], %s254
          %s257 = sshll.u32 [#allocation7], 4
          %s258 = int_to_ptr.vmem [resolvable:$true] %s257
          %260 = dma.hbm_to_vmem [thread:$0]  %s2, 64, %s258, [#allocation6]
        $region24: #{tpu_custom_call.1} parent=11 // pred_fallthru
          _
        // Predicated region
        $region25: #{tpu_custom_call.1} parent=11 // pred_check
          %p261 = pneg %p105
        $region26: #{tpu_custom_call.1} parent=11 // pred_check_branch
          %263 = sbr.rel (%p261) target = $region28
        $region27: #{tpu_custom_call.1} parent=11 // pred_region
          _
        $region28: #{tpu_custom_call.1} parent=11 // pred_fallthru
          _
      $region12: #{tpu_custom_call.1} parent=5 // pred_fallthru
        _
      %p264 = scmp.lt.s32.totalorder %s21, 2
      // Predicated region
      $region29: #{tpu_custom_call.1} parent=5 // pred_check
        %p265 = pneg %p264
      $region30: #{tpu_custom_call.1} parent=5 // pred_check_branch
        %267 = sbr.rel (%p265) target = $region32
      $region31: #{tpu_custom_call.1} parent=5 // pred_region
        // Predicated region
        $region33: #{tpu_custom_call.1} parent=31 // pred_check
          %p268 = pneg %p125
        $region34: #{tpu_custom_call.1} parent=31 // pred_check_branch
          %270 = sbr.rel (%p268) target = $region36
        $region35: #{tpu_custom_call.1} parent=31 // pred_region
          %s271 = sand.u32 %s21, 1
          %s272 = scalar_lea.sflag [#allocation9], %s271
          %s273 = sand.u32 %s115, 1
          %s274 = smul.addr %s273, 512
          %s275 = scalar_lea.vmem [#allocation8], %s274
          %s276 = smul.u32 2, %s21
          %s278 = ssub.s32 8192, 8192
          %279 = vsyncadd %s272, %s278
          %s280 = smul.addr %s276, 64
          %s281 = scalar_lea.hbm %s4, %s280
          %s282 = sshll.u32 %s275, 4
          %s283 = int_to_ptr.vmem [resolvable:$true] %s282
          %288 = dma.hbm_to_vmem [thread:$0]  %s281, 8192, %s283, %s272, 256, 128, 8
        $region36: #{tpu_custom_call.1} parent=31 // pred_fallthru
          _
        // Predicated region
        $region37: #{tpu_custom_call.1} parent=31 // pred_check
          %p289 = pneg %p151
        $region38: #{tpu_custom_call.1} parent=31 // pred_check_branch
          %291 = sbr.rel (%p289) target = $region40
        $region39: #{tpu_custom_call.1} parent=31 // pred_region
          %s292 = smul.u32 2, %s21
          %p293 = scmp.lt.s32.totalorder %s292, 3
          %s294 = scalar_select %p293, %s292, 3
          %s295 = scalar_lea.vmem %s5, %s294
          %s296 = smul.u32 2, %s21
        $region40: #{tpu_custom_call.1} parent=31 // pred_fallthru
          _
        // Predicated region
        $region41: #{tpu_custom_call.1} parent=31 // pred_check
          %p297 = pneg %p177
        $region42: #{tpu_custom_call.1} parent=31 // pred_check_branch
          %299 = sbr.rel (%p297) target = $region44
        $region43: #{tpu_custom_call.1} parent=31 // pred_region
          %s300 = sand.u32 %s21, 1
          %s301 = scalar_lea.sflag [#allocation9], %s300
          %s302 = sand.u32 %s167, 1
          %s303 = smul.addr %s302, 2
          %s304 = scalar_lea.vmem [#allocation10], %s303
          %s305 = smul.u32 2, %s21
          %s307 = ssub.s32 32, 32
          %308 = vsyncadd %s301, %s307
          %s309 = smul.addr %s305, 16
          %s310 = scalar_lea.hbm %s6, %s309
          %s312 = sshll.u32 %s304, 4
          %s313 = int_to_ptr.vmem [resolvable:$true] %s312
          %315 = dma.hbm_to_vmem [thread:$0]  %s310, 32, %s313, %s301
        $region44: #{tpu_custom_call.1} parent=31 // pred_fallthru
          _
      $region32: #{tpu_custom_call.1} parent=5 // pred_fallthru
        _
      %p316 = scmp.le.s32.totalorder 1, %s21
      %p317 = scmp.lt.s32.totalorder %s21, 3
      %p318 = pnand %p316, %p317
      %p319 = pneg %p318
      // Predicated region
      $region45: #{tpu_custom_call.1} parent=5 // pred_check
        _
      $region46: #{tpu_custom_call.1} parent=5 // pred_check_branch
        %321 = sbr.rel (%p318) target = $region48
      $region47: #{tpu_custom_call.1} parent=5 // pred_region
        %s322 = ssub.s32 %s21, 1
        // Predicated region
        $region49: #{tpu_custom_call.1} parent=47 // pred_check
          %p323 = pneg %p42
        $region50: #{tpu_custom_call.1} parent=47 // pred_check_branch
          %325 = sbr.rel (%p323) target = $region52
        $region51: #{tpu_custom_call.1} parent=47 // pred_region
          %326 = dma.done [#allocation3], 1024
        $region52: #{tpu_custom_call.1} parent=47 // pred_fallthru
          _
        // Predicated region
        $region53: #{tpu_custom_call.1} parent=47 // pred_check
          %p327 = pneg %p63
        $region54: #{tpu_custom_call.1} parent=47 // pred_check_branch
          %329 = sbr.rel (%p327) target = $region56
        $region55: #{tpu_custom_call.1} parent=47 // pred_region
          %330 = dma.done [#allocation6], 4096
        $region56: #{tpu_custom_call.1} parent=47 // pred_fallthru
          _
        // Predicated region
        $region57: #{tpu_custom_call.1} parent=47 // pred_check
          %p331 = pneg %p84
        $region58: #{tpu_custom_call.1} parent=47 // pred_check_branch
          %333 = sbr.rel (%p331) target = $region60
        $region59: #{tpu_custom_call.1} parent=47 // pred_region
          %334 = dma.done [#allocation6], 64
        $region60: #{tpu_custom_call.1} parent=47 // pred_fallthru
          _
        %s335 = sand.u32 %s26, 1
        %s336 = scalar_lea.sflag [#allocation9], %s335
        %s337 = sand.u32 %s118, 1
        %s338 = smul.addr %s337, 512
        %s339 = scalar_lea.vmem [#allocation8], %s338
        // Predicated region
        $region61: #{tpu_custom_call.1} parent=47 // pred_check
          %p340 = pneg %p131
        $region62: #{tpu_custom_call.1} parent=47 // pred_check_branch
          %342 = sbr.rel (%p340) target = $region64
        $region63: #{tpu_custom_call.1} parent=47 // pred_region
          %343 = dma.done %s336, 8192
        $region64: #{tpu_custom_call.1} parent=47 // pred_fallthru
          _
        %s344 = sand.u32 %s26, 1
        %s345 = scalar_lea.sflag [#allocation9], %s344
        %s346 = sand.u32 %s170, 1
        %s347 = smul.addr %s346, 2
        %s348 = scalar_lea.vmem [#allocation10], %s347
        // Predicated region
        $region65: #{tpu_custom_call.1} parent=47 // pred_check
          %p349 = pneg %p183
        $region66: #{tpu_custom_call.1} parent=47 // pred_check_branch
          %351 = sbr.rel (%p349) target = $region68
        $region67: #{tpu_custom_call.1} parent=47 // pred_region
          %352 = dma.done %s345, 32
        $region68: #{tpu_custom_call.1} parent=47 // pred_fallthru
          _
        %p353 = pneg %p42
        %p354 = pneg %p39
        %p355 = pneg %p63
        %p356 = pneg %p60
        %p357 = pneg %p84
        %p358 = pneg %p81
        %p359 = pneg %p105
        %p360 = pneg %p102
        %s361 = sand.u32 %s26, 1
        %s362 = scalar_lea.sflag [#allocation9], %s361
        %s363 = sand.u32 %s118, 1
        %s364 = smul.addr %s363, 512
        %s365 = scalar_lea.vmem [#allocation8], %s364
        %p366 = pneg %p131
        %p367 = pneg %p128
        %s368 = smul.u32 2, %s26
        %p369 = scmp.lt.s32.totalorder %s368, 3
        %s370 = scalar_select %p369, %s368, 3
        %s371 = scalar_lea.vmem %s5, %s370
        %p372 = pneg %p157
        %p373 = pneg %p154
        %s374 = sand.u32 %s26, 1
        %s375 = scalar_lea.sflag [#allocation9], %s374
        %s376 = sand.u32 %s170, 1
        %s377 = smul.addr %s376, 2
        %s378 = scalar_lea.vmem [#allocation10], %s377
        %p379 = pneg %p183
        %p380 = pneg %p180
        %p381 = pneg %p209
        %p382 = pneg %p206
        %s383 = sand.u32 %s196, 1
        %s384 = scalar_lea.sflag [#allocation4], %s383
        %s385 = sand.u32 %s196, 1
        %s386 = smul.addr %s385, 128
        %s387 = scalar_lea.vmem [#allocation11], %s386
        %s388 = smul.u32 2, %s26
        %s389 = smul.u32 2, %s26
        %p390 = scmp.lt.s32.totalorder %s389, 3
        %s391 = scalar_select %p390, %s389, 3
        %s392 = scalar_lea.vmem %s5, %s391
        %s393 = smul.u32 2, %s26
        %s394 = smul.u32 2, %s26
        %s395 = smul.u32 2, %s26
        %v397 = vld [vmem:[#allocation2] sm:$0xff]
        %v398 = vld [vmem:[#allocation2 + $0x8] sm:$0xff]
        %v399 = vld [vmem:[#allocation2 + $0x10] sm:$0xff]
        %v400 = vld [vmem:[#allocation2 + $0x18] sm:$0xff]
        %v401 = vld [vmem:[#allocation2 + $0x20] sm:$0xff]
        %v402 = vld [vmem:[#allocation2 + $0x28] sm:$0xff]
        %v403 = vld [vmem:[#allocation2 + $0x30] sm:$0xff]
        %v404 = vld [vmem:[#allocation2 + $0x38] sm:$0xff]
        %v405 = vpack.c.bf16 %v398, %v397
        %v406 = vpack.c.bf16 %v400, %v399
        %v407 = vpack.c.bf16 %v402, %v401
        %v408 = vpack.c.bf16 %v404, %v403
        %v409 = vld [vmem:[#allocation5] sm:$0xff]
        %v410 = vld [vmem:[#allocation5 + $0x8] sm:$0xff]
        %v411 = vld [vmem:[#allocation5 + $0x10] sm:$0xff]
        %v412 = vld [vmem:[#allocation5 + $0x18] sm:$0xff]
        %v413 = vld [vmem:[#allocation5 + $0x20] sm:$0xff]
        %v414 = vld [vmem:[#allocation5 + $0x28] sm:$0xff]
        %v415 = vld [vmem:[#allocation5 + $0x30] sm:$0xff]
        %v416 = vld [vmem:[#allocation5 + $0x38] sm:$0xff]
        %v417 = vld [vmem:[#allocation5 + $0x40] sm:$0xff]
        %v418 = vld [vmem:[#allocation5 + $0x48] sm:$0xff]
        %v419 = vld [vmem:[#allocation5 + $0x50] sm:$0xff]
        %v420 = vld [vmem:[#allocation5 + $0x58] sm:$0xff]
        %v421 = vld [vmem:[#allocation5 + $0x60] sm:$0xff]
        %v422 = vld [vmem:[#allocation5 + $0x68] sm:$0xff]
        %v423 = vld [vmem:[#allocation5 + $0x70] sm:$0xff]
        %v424 = vld [vmem:[#allocation5 + $0x78] sm:$0xff]
        %v425 = vld [vmem:[#allocation5 + $0x80] sm:$0xff]
        %v426 = vld [vmem:[#allocation5 + $0x88] sm:$0xff]
        %v427 = vld [vmem:[#allocation5 + $0x90] sm:$0xff]
        %v428 = vld [vmem:[#allocation5 + $0x98] sm:$0xff]
        %v429 = vld [vmem:[#allocation5 + $0xa0] sm:$0xff]
        %v430 = vld [vmem:[#allocation5 + $0xa8] sm:$0xff]
        %v431 = vld [vmem:[#allocation5 + $0xb0] sm:$0xff]
        %v432 = vld [vmem:[#allocation5 + $0xb8] sm:$0xff]
        %v433 = vld [vmem:[#allocation5 + $0xc0] sm:$0xff]
        %v434 = vld [vmem:[#allocation5 + $0xc8] sm:$0xff]
        %v435 = vld [vmem:[#allocation5 + $0xd0] sm:$0xff]
        %v436 = vld [vmem:[#allocation5 + $0xd8] sm:$0xff]
        %v437 = vld [vmem:[#allocation5 + $0xe0] sm:$0xff]
        %v438 = vld [vmem:[#allocation5 + $0xe8] sm:$0xff]
        %v439 = vld [vmem:[#allocation5 + $0xf0] sm:$0xff]
        %v440 = vld [vmem:[#allocation5 + $0xf8] sm:$0xff]
        %v473 = vunpack.c.l.b16 %v409
        %v474 = vunpack.c.h.b16 %v409
        %v475 = vunpack.c.l.b16 %v410
        %v476 = vunpack.c.h.b16 %v410
        %v477 = vunpack.c.l.b16 %v411
        %v478 = vunpack.c.h.b16 %v411
        %v479 = vunpack.c.l.b16 %v412
        %v480 = vunpack.c.h.b16 %v412
        %v481 = vunpack.c.l.b16 %v413
        %v482 = vunpack.c.h.b16 %v413
        %v483 = vunpack.c.l.b16 %v414
        %v484 = vunpack.c.h.b16 %v414
        %v485 = vunpack.c.l.b16 %v415
        %v486 = vunpack.c.h.b16 %v415
        %v487 = vunpack.c.l.b16 %v416
        %v488 = vunpack.c.h.b16 %v416
        %v489 = vunpack.c.l.b16 %v417
        %v490 = vunpack.c.h.b16 %v417
        %v491 = vunpack.c.l.b16 %v418
        %v492 = vunpack.c.h.b16 %v418
        %v493 = vunpack.c.l.b16 %v419
        %v494 = vunpack.c.h.b16 %v419
        %v495 = vunpack.c.l.b16 %v420
        %v496 = vunpack.c.h.b16 %v420
        %v497 = vunpack.c.l.b16 %v421
        %v498 = vunpack.c.h.b16 %v421
        %v499 = vunpack.c.l.b16 %v422
        %v500 = vunpack.c.h.b16 %v422
        %v501 = vunpack.c.l.b16 %v423
        %v502 = vunpack.c.h.b16 %v423
        %v503 = vunpack.c.l.b16 %v424
        %v504 = vunpack.c.h.b16 %v424
        %v505 = vunpack.c.l.b16 %v425
        %v506 = vunpack.c.h.b16 %v425
        %v507 = vunpack.c.l.b16 %v426
        %v508 = vunpack.c.h.b16 %v426
        %v509 = vunpack.c.l.b16 %v427
        %v510 = vunpack.c.h.b16 %v427
        %v511 = vunpack.c.l.b16 %v428
        %v512 = vunpack.c.h.b16 %v428
        %v513 = vunpack.c.l.b16 %v429
        %v514 = vunpack.c.h.b16 %v429
        %v515 = vunpack.c.l.b16 %v430
        %v516 = vunpack.c.h.b16 %v430
        %v517 = vunpack.c.l.b16 %v431
        %v518 = vunpack.c.h.b16 %v431
        %v519 = vunpack.c.l.b16 %v432
        %v520 = vunpack.c.h.b16 %v432
        %v521 = vunpack.c.l.b16 %v433
        %v522 = vunpack.c.h.b16 %v433
        %v523 = vunpack.c.l.b16 %v434
        %v524 = vunpack.c.h.b16 %v434
        %v525 = vunpack.c.l.b16 %v435
        %v526 = vunpack.c.h.b16 %v435
        %v527 = vunpack.c.l.b16 %v436
        %v528 = vunpack.c.h.b16 %v436
        %v529 = vunpack.c.l.b16 %v437
        %v530 = vunpack.c.h.b16 %v437
        %v531 = vunpack.c.l.b16 %v438
        %v532 = vunpack.c.h.b16 %v438
        %v533 = vunpack.c.l.b16 %v439
        %v534 = vunpack.c.h.b16 %v439
        %v535 = vunpack.c.l.b16 %v440
        %v536 = vunpack.c.h.b16 %v440
        %v537 = vpack.c.b16 %v477, %v473
        %v538 = vpack.c.b16 %v478, %v474
        %v539 = vpack.c.b16 %v479, %v475
        %v540 = vpack.c.b16 %v480, %v476
        %v541 = vpack.c.b16 %v485, %v481
        %v542 = vpack.c.b16 %v486, %v482
        %v543 = vpack.c.b16 %v487, %v483
        %v544 = vpack.c.b16 %v488, %v484
        %v545 = vpack.c.b16 %v493, %v489
        %v546 = vpack.c.b16 %v494, %v490
        %v547 = vpack.c.b16 %v495, %v491
        %v548 = vpack.c.b16 %v496, %v492
        %v549 = vpack.c.b16 %v501, %v497
        %v550 = vpack.c.b16 %v502, %v498
        %v551 = vpack.c.b16 %v503, %v499
        %v552 = vpack.c.b16 %v504, %v500
        %v553 = vpack.c.b16 %v509, %v505
        %v554 = vpack.c.b16 %v510, %v506
        %v555 = vpack.c.b16 %v511, %v507
        %v556 = vpack.c.b16 %v512, %v508
        %v557 = vpack.c.b16 %v517, %v513
        %v558 = vpack.c.b16 %v518, %v514
        %v559 = vpack.c.b16 %v519, %v515
        %v560 = vpack.c.b16 %v520, %v516
        %v561 = vpack.c.b16 %v525, %v521
        %v562 = vpack.c.b16 %v526, %v522
        %v563 = vpack.c.b16 %v527, %v523
        %v564 = vpack.c.b16 %v528, %v524
        %v565 = vpack.c.b16 %v533, %v529
        %v566 = vpack.c.b16 %v534, %v530
        %v567 = vpack.c.b16 %v535, %v531
        %v568 = vpack.c.b16 %v536, %v532
        %601 = vmatprep.subr.bf16.mxu0 %v566
        %602 = vmatpush1.bf16.msra.mxu0 %v565
        %603 = vmatprep.subr.bf16.mxu0 %v562
        %604 = vmatpush1.bf16.msra.mxu0 %v561
        %605 = vmatprep.subr.bf16.mxu0 %v558
        %606 = vmatpush1.bf16.msra.mxu0 %v557
        %607 = vmatprep.subr.bf16.mxu0 %v554
        %608 = vmatpush1.bf16.msra.mxu0 %v553
        %609 = vmatprep.subr.bf16.mxu0 %v550
        %610 = vmatpush1.bf16.msra.mxu0 %v549
        %611 = vmatprep.subr.bf16.mxu0 %v546
        %612 = vmatpush1.bf16.msra.mxu0 %v545
        %613 = vmatprep.subr.bf16.mxu0 %v542
        %614 = vmatpush1.bf16.msra.mxu0 %v541
        %615 = vmatprep.subr.bf16.mxu0 %v538
        %616 = vmatpush1.bf16.msra.mxu0 %v537
        %617 = vmatprep.subr.bf16.mxu0 0
        %618 = vmatpush2.bf16.msra.mxu0 0
        %619 = vmatprep.subr.bf16.mxu0 0
        %620 = vmatpush2.bf16.msra.mxu0 0
        %621 = vmatprep.subr.bf16.mxu0 0
        %622 = vmatpush2.bf16.msra.mxu0 0
        %623 = vmatprep.subr.bf16.mxu0 0
        %624 = vmatpush2.bf16.msra.mxu0 0
        %625 = vmatprep.subr.bf16.mxu0 0
        %626 = vmatpush2.bf16.msra.mxu0 0
        %627 = vmatprep.subr.bf16.mxu0 0
        %628 = vmatpush2.bf16.msra.mxu0 0
        %629 = vmatprep.subr.bf16.mxu0 0
        %630 = vmatpush2.bf16.msra.mxu0 0
        %631 = vmatprep.subr.bf16.mxu0 0
        %632 = vmatpush2.bf16.msra.mxu0 0
        %633 = vmatprep.mubr.bf16.mxu0 0
        %634 = vmatmul.mubr.bf16.gmra.mxu0 %v405
        %v635 = vpop.f32.mrf.mxu0
        %v636 = vadd.f32 0.0, %v635
        %v637 = vpop.f32.mrf.mxu0
        %v638 = vadd.f32 0.0, %v637
        %v639 = vpop.f32.mrf.mxu0
        %v640 = vadd.f32 0.0, %v639
        %v641 = vpop.f32.mrf.mxu0
        %v642 = vadd.f32 0.0, %v641
        %643 = vmatprep.mubr.bf16.mxu0 0
        %644 = vmatmul.mubr.bf16.gmra.mxu0 %v406
        %v645 = vpop.f32.mrf.mxu0
        %v646 = vadd.f32 0.0, %v645
        %v647 = vpop.f32.mrf.mxu0
        %v648 = vadd.f32 0.0, %v647
        %v649 = vpop.f32.mrf.mxu0
        %v650 = vadd.f32 0.0, %v649
        %v651 = vpop.f32.mrf.mxu0
        %v652 = vadd.f32 0.0, %v651
        %653 = vmatprep.mubr.bf16.mxu0 0
        %654 = vmatmul.mubr.bf16.gmra.mxu0 %v407
        %v655 = vpop.f32.mrf.mxu0
        %v656 = vadd.f32 0.0, %v655
        %v657 = vpop.f32.mrf.mxu0
        %v658 = vadd.f32 0.0, %v657
        %v659 = vpop.f32.mrf.mxu0
        %v660 = vadd.f32 0.0, %v659
        %v661 = vpop.f32.mrf.mxu0
        %v662 = vadd.f32 0.0, %v661
        %663 = vmatprep.mubr.bf16.mxu0 0
        %664 = vmatmul.mubr.bf16.gmra.mxu0 %v408
        %v665 = vpop.f32.mrf.mxu0
        %v666 = vadd.f32 0.0, %v665
        %v667 = vpop.f32.mrf.mxu0
        %v668 = vadd.f32 0.0, %v667
        %v669 = vpop.f32.mrf.mxu0
        %v670 = vadd.f32 0.0, %v669
        %v671 = vpop.f32.mrf.mxu0
        %v672 = vadd.f32 0.0, %v671
        %673 = vdwg.mxu0
        %674 = vmatprep.subr.bf16.mxu0 %v568
        %675 = vmatpush1.bf16.msra.mxu0 %v567
        %676 = vmatprep.subr.bf16.mxu0 %v564
        %677 = vmatpush1.bf16.msra.mxu0 %v563
        %678 = vmatprep.subr.bf16.mxu0 %v560
        %679 = vmatpush1.bf16.msra.mxu0 %v559
        %680 = vmatprep.subr.bf16.mxu0 %v556
        %681 = vmatpush1.bf16.msra.mxu0 %v555
        %682 = vmatprep.subr.bf16.mxu0 %v552
        %683 = vmatpush1.bf16.msra.mxu0 %v551
        %684 = vmatprep.subr.bf16.mxu0 %v548
        %685 = vmatpush1.bf16.msra.mxu0 %v547
        %686 = vmatprep.subr.bf16.mxu0 %v544
        %687 = vmatpush1.bf16.msra.mxu0 %v543
        %688 = vmatprep.subr.bf16.mxu0 %v540
        %689 = vmatpush1.bf16.msra.mxu0 %v539
        %690 = vmatprep.subr.bf16.mxu0 0
        %691 = vmatpush2.bf16.msra.mxu0 0
        %692 = vmatprep.subr.bf16.mxu0 0
        %693 = vmatpush2.bf16.msra.mxu0 0
        %694 = vmatprep.subr.bf16.mxu0 0
        %695 = vmatpush2.bf16.msra.mxu0 0
        %696 = vmatprep.subr.bf16.mxu0 0
        %697 = vmatpush2.bf16.msra.mxu0 0
        %698 = vmatprep.subr.bf16.mxu0 0
        %699 = vmatpush2.bf16.msra.mxu0 0
        %700 = vmatprep.subr.bf16.mxu0 0
        %701 = vmatpush2.bf16.msra.mxu0 0
        %702 = vmatprep.subr.bf16.mxu0 0
        %703 = vmatpush2.bf16.msra.mxu0 0
        %704 = vmatprep.subr.bf16.mxu0 0
        %705 = vmatpush2.bf16.msra.mxu0 0
        %706 = vmatprep.mubr.bf16.mxu0 0
        %707 = vmatmul.mubr.bf16.gmra.mxu0 %v405
        %v708 = vpop.f32.mrf.mxu0
        %v709 = vadd.f32 0.0, %v708
        %v710 = vpop.f32.mrf.mxu0
        %v711 = vadd.f32 0.0, %v710
        %v712 = vpop.f32.mrf.mxu0
        %v713 = vadd.f32 0.0, %v712
        %v714 = vpop.f32.mrf.mxu0
        %v715 = vadd.f32 0.0, %v714
        %716 = vmatprep.mubr.bf16.mxu0 0
        %717 = vmatmul.mubr.bf16.gmra.mxu0 %v406
        %v718 = vpop.f32.mrf.mxu0
        %v719 = vadd.f32 0.0, %v718
        %v720 = vpop.f32.mrf.mxu0
        %v721 = vadd.f32 0.0, %v720
        %v722 = vpop.f32.mrf.mxu0
        %v723 = vadd.f32 0.0, %v722
        %v724 = vpop.f32.mrf.mxu0
        %v725 = vadd.f32 0.0, %v724
        %726 = vmatprep.mubr.bf16.mxu0 0
        %727 = vmatmul.mubr.bf16.gmra.mxu0 %v407
        %v728 = vpop.f32.mrf.mxu0
        %v729 = vadd.f32 0.0, %v728
        %v730 = vpop.f32.mrf.mxu0
        %v731 = vadd.f32 0.0, %v730
        %v732 = vpop.f32.mrf.mxu0
        %v733 = vadd.f32 0.0, %v732
        %v734 = vpop.f32.mrf.mxu0
        %v735 = vadd.f32 0.0, %v734
        %736 = vmatprep.mubr.bf16.mxu0 0
        %737 = vmatmul.mubr.bf16.gmra.mxu0 %v408
        %v738 = vpop.f32.mrf.mxu0
        %v739 = vadd.f32 0.0, %v738
        %v740 = vpop.f32.mrf.mxu0
        %v741 = vadd.f32 0.0, %v740
        %v742 = vpop.f32.mrf.mxu0
        %v743 = vadd.f32 0.0, %v742
        %v744 = vpop.f32.mrf.mxu0
        %v745 = vadd.f32 0.0, %v744
        %746 = vdwg.mxu0
        %v747 = vadd.f32 %v636, %v640
        %v748 = vadd.f32 %v747, %v646
        %v749 = vadd.f32 %v748, %v650
        %v750 = vadd.f32 %v749, %v656
        %v751 = vadd.f32 %v750, %v660
        %v752 = vadd.f32 %v751, %v666
        %v753 = vadd.f32 %v752, %v670
        %v754 = vrot.slane %v753, 4
        %v755 = vadd.f32 %v753, %v754
        %v756 = vrot.slane %v755, 2
        %v757 = vadd.f32 %v755, %v756
        %v758 = vrot.slane %v757, 1
        %v759 = vadd.f32 %v757, %v758
        %v760 = vadd.f32 %v638, %v642
        %v761 = vadd.f32 %v760, %v648
        %v762 = vadd.f32 %v761, %v652
        %v763 = vadd.f32 %v762, %v658
        %v764 = vadd.f32 %v763, %v662
        %v765 = vadd.f32 %v764, %v668
        %v766 = vadd.f32 %v765, %v672
        %v767 = vrot.slane %v766, 4
        %v768 = vadd.f32 %v766, %v767
        %v769 = vrot.slane %v768, 2
        %v770 = vadd.f32 %v768, %v769
        %v771 = vrot.slane %v770, 1
        %v772 = vadd.f32 %v770, %v771
        %v773 = vadd.f32 %v709, %v713
        %v774 = vadd.f32 %v773, %v719
        %v775 = vadd.f32 %v774, %v723
        %v776 = vadd.f32 %v775, %v729
        %v777 = vadd.f32 %v776, %v733
        %v778 = vadd.f32 %v777, %v739
        %v779 = vadd.f32 %v778, %v743
        %v780 = vrot.slane %v779, 4
        %v781 = vadd.f32 %v779, %v780
        %v782 = vrot.slane %v781, 2
        %v783 = vadd.f32 %v781, %v782
        %v784 = vrot.slane %v783, 1
        %v785 = vadd.f32 %v783, %v784
        %v786 = vadd.f32 %v711, %v715
        %v787 = vadd.f32 %v786, %v721
        %v788 = vadd.f32 %v787, %v725
        %v789 = vadd.f32 %v788, %v731
        %v790 = vadd.f32 %v789, %v735
        %v791 = vadd.f32 %v790, %v741
        %v792 = vadd.f32 %v791, %v745
        %v793 = vrot.slane %v792, 4
        %v794 = vadd.f32 %v792, %v793
        %v795 = vrot.slane %v794, 2
        %v796 = vadd.f32 %v794, %v795
        %v797 = vrot.slane %v796, 1
        %v798 = vadd.f32 %v796, %v797
        %v799 = vrcp.pop 64.0
        %v800 = vmul.f32 %v759, %v799
        %v801 = vmul.f32 %v772, %v799
        %v802 = vmul.f32 %v785, %v799
        %v803 = vmul.f32 %v798, %v799
        %v804 = vmul.f32 %v636, %v636
        %v805 = vmul.f32 %v638, %v638
        %v806 = vmul.f32 %v709, %v709
        %v807 = vmul.f32 %v711, %v711
        %v808 = vmul.f32 %v640, %v640
        %v809 = vmul.f32 %v642, %v642
        %v810 = vmul.f32 %v713, %v713
        %v811 = vmul.f32 %v715, %v715
        %v812 = vmul.f32 %v646, %v646
        %v813 = vmul.f32 %v648, %v648
        %v814 = vmul.f32 %v719, %v719
        %v815 = vmul.f32 %v721, %v721
        %v816 = vmul.f32 %v650, %v650
        %v817 = vmul.f32 %v652, %v652
        %v818 = vmul.f32 %v723, %v723
        %v819 = vmul.f32 %v725, %v725
        %v820 = vmul.f32 %v656, %v656
        %v821 = vmul.f32 %v658, %v658
        %v822 = vmul.f32 %v729, %v729
        %v823 = vmul.f32 %v731, %v731
        %v824 = vmul.f32 %v660, %v660
        %v825 = vmul.f32 %v662, %v662
        %v826 = vmul.f32 %v733, %v733
        %v827 = vmul.f32 %v735, %v735
        %v828 = vmul.f32 %v666, %v666
        %v829 = vmul.f32 %v668, %v668
        %v830 = vmul.f32 %v739, %v739
        %v831 = vmul.f32 %v741, %v741
        %v832 = vmul.f32 %v670, %v670
        %v833 = vmul.f32 %v672, %v672
        %v834 = vmul.f32 %v743, %v743
        %v835 = vmul.f32 %v745, %v745
        %v836 = vadd.f32 %v804, %v808
        %v837 = vadd.f32 %v836, %v812
        %v838 = vadd.f32 %v837, %v816
        %v839 = vadd.f32 %v838, %v820
        %v840 = vadd.f32 %v839, %v824
        %v841 = vadd.f32 %v840, %v828
        %v842 = vadd.f32 %v841, %v832
        %v843 = vrot.slane %v842, 4
        %v844 = vadd.f32 %v842, %v843
        %v845 = vrot.slane %v844, 2
        %v846 = vadd.f32 %v844, %v845
        %v847 = vrot.slane %v846, 1
        %v848 = vadd.f32 %v846, %v847
        %v849 = vadd.f32 %v805, %v809
        %v850 = vadd.f32 %v849, %v813
        %v851 = vadd.f32 %v850, %v817
        %v852 = vadd.f32 %v851, %v821
        %v853 = vadd.f32 %v852, %v825
        %v854 = vadd.f32 %v853, %v829
        %v855 = vadd.f32 %v854, %v833
        %v856 = vrot.slane %v855, 4
        %v857 = vadd.f32 %v855, %v856
        %v858 = vrot.slane %v857, 2
        %v859 = vadd.f32 %v857, %v858
        %v860 = vrot.slane %v859, 1
        %v861 = vadd.f32 %v859, %v860
        %v862 = vadd.f32 %v806, %v810
        %v863 = vadd.f32 %v862, %v814
        %v864 = vadd.f32 %v863, %v818
        %v865 = vadd.f32 %v864, %v822
        %v866 = vadd.f32 %v865, %v826
        %v867 = vadd.f32 %v866, %v830
        %v868 = vadd.f32 %v867, %v834
        %v869 = vrot.slane %v868, 4
        %v870 = vadd.f32 %v868, %v869
        %v871 = vrot.slane %v870, 2
        %v872 = vadd.f32 %v870, %v871
        %v873 = vrot.slane %v872, 1
        %v874 = vadd.f32 %v872, %v873
        %v875 = vadd.f32 %v807, %v811
        %v876 = vadd.f32 %v875, %v815
        %v877 = vadd.f32 %v876, %v819
        %v878 = vadd.f32 %v877, %v823
        %v879 = vadd.f32 %v878, %v827
        %v880 = vadd.f32 %v879, %v831
        %v881 = vadd.f32 %v880, %v835
        %v882 = vrot.slane %v881, 4
        %v883 = vadd.f32 %v881, %v882
        %v884 = vrot.slane %v883, 2
        %v885 = vadd.f32 %v883, %v884
        %v886 = vrot.slane %v885, 1
        %v887 = vadd.f32 %v885, %v886
        %v888 = vmul.f32 %v848, %v799
        %v889 = vmul.f32 %v861, %v799
        %v890 = vmul.f32 %v874, %v799
        %v891 = vmul.f32 %v887, %v799
        %v892 = vmul.f32 %v800, %v800
        %v893 = vmul.f32 %v801, %v801
        %v894 = vmul.f32 %v802, %v802
        %v895 = vmul.f32 %v803, %v803
        %v896 = vsub.f32 %v888, %v892
        %v897 = vsub.f32 %v889, %v893
        %v898 = vsub.f32 %v890, %v894
        %v899 = vsub.f32 %v891, %v895
        %v900 = vld [vmem:[#allocation7] sm:$0xf]
        %v901 = vadd.f32 %v896, 1e-05
        %v902 = vadd.f32 %v897, 1e-05
        %v903 = vadd.f32 %v898, 1e-05
        %v904 = vadd.f32 %v899, 1e-05
        %v905 = vrsqrt.pop %v901
        %v906 = vrsqrt.pop %v902
        %v907 = vrsqrt.pop %v903
        %v908 = vrsqrt.pop %v904
        %v913 = vcombine.low %v905, %v906
        %v914 = vcombine.low %v907, %v908
        %v916 = vunpack.c.l.s4 1966171168
        %v917 = vunpack.c.0.s8 %v916
        %v918 = vlaneseq
        %v919 = vshrl.u32 %v918, 7
        %v920 = vsub.s32 %v917, %v919
        %v921 = vrot.slane %v913, %v920
        %v923 = vunpack.c.l.s4 1966171168
        %v924 = vunpack.c.0.s8 %v923
        %v925 = vlaneseq
        %v926 = vshrl.u32 %v925, 7
        %v927 = vsub.s32 %v924, %v926
        %v928 = vrot.slane %v914, %v927
        %v929 = vcombine.low %v921, %v928
        %v931 = vunpack.c.l.s4 1966171168
        %v932 = vunpack.c.0.s8 %v931
        %v933 = vlaneseq
        %v934 = vshrl.u32 %v933, 7
        %v935 = vsub.s32 %v932, %v934
        %v936 = vrot.slane %v929, %v935
        %v938 = vmul.f32 %v900, %v936
        %v939 = vld [vmem:[%s3] sm:$0xf]
        %v941 = vlaneseq
        %v942 = vshrl.u32 %v941, 7
        %v943 = vsub.s32 0, %v942
        %v944 = vrot.slane %v938, %v943
        %v945 = vlaneseq
        %v946 = vshrl.u32 %v945, 7
        %v947 = vsub.s32 1, %v946
        %v948 = vrot.slane %v938, %v947
        %v949 = vlaneseq
        %v950 = vshrl.u32 %v949, 7
        %v951 = vsub.s32 2, %v950
        %v952 = vrot.slane %v938, %v951
        %v953 = vlaneseq
        %v954 = vshrl.u32 %v953, 7
        %v955 = vsub.s32 3, %v954
        %v956 = vrot.slane %v938, %v955
        %v961 = vmul.f32 %v800, %v944
        %v962 = vmul.f32 %v801, %v948
        %v963 = vmul.f32 %v802, %v952
        %v964 = vmul.f32 %v803, %v956
        %v969 = vcombine.low %v961, %v962
        %v970 = vcombine.low %v963, %v964
        %v972 = vunpack.c.l.s4 1966171168
        %v973 = vunpack.c.0.s8 %v972
        %v974 = vlaneseq
        %v975 = vshrl.u32 %v974, 7
        %v976 = vsub.s32 %v973, %v975
        %v977 = vrot.slane %v969, %v976
        %v979 = vunpack.c.l.s4 1966171168
        %v980 = vunpack.c.0.s8 %v979
        %v981 = vlaneseq
        %v982 = vshrl.u32 %v981, 7
        %v983 = vsub.s32 %v980, %v982
        %v984 = vrot.slane %v970, %v983
        %v985 = vcombine.low %v977, %v984
        %v987 = vunpack.c.l.s4 1966171168
        %v988 = vunpack.c.0.s8 %v987
        %v989 = vlaneseq
        %v990 = vshrl.u32 %v989, 7
        %v991 = vsub.s32 %v988, %v990
        %v992 = vrot.slane %v985, %v991
        %v994 = vsub.f32 %v939, %v992
        %v995 = vmul.f32 %v636, %v944
        %v996 = vmul.f32 %v638, %v948
        %v997 = vmul.f32 %v709, %v952
        %v998 = vmul.f32 %v711, %v956
        %v999 = vmul.f32 %v640, %v944
        %v1000 = vmul.f32 %v642, %v948
        %v1001 = vmul.f32 %v713, %v952
        %v1002 = vmul.f32 %v715, %v956
        %v1003 = vmul.f32 %v646, %v944
        %v1004 = vmul.f32 %v648, %v948
        %v1005 = vmul.f32 %v719, %v952
        %v1006 = vmul.f32 %v721, %v956
        %v1007 = vmul.f32 %v650, %v944
        %v1008 = vmul.f32 %v652, %v948
        %v1009 = vmul.f32 %v723, %v952
        %v1010 = vmul.f32 %v725, %v956
        %v1011 = vmul.f32 %v656, %v944
        %v1012 = vmul.f32 %v658, %v948
        %v1013 = vmul.f32 %v729, %v952
        %v1014 = vmul.f32 %v731, %v956
        %v1015 = vmul.f32 %v660, %v944
        %v1016 = vmul.f32 %v662, %v948
        %v1017 = vmul.f32 %v733, %v952
        %v1018 = vmul.f32 %v735, %v956
        %v1019 = vmul.f32 %v666, %v944
        %v1020 = vmul.f32 %v668, %v948
        %v1021 = vmul.f32 %v739, %v952
        %v1022 = vmul.f32 %v741, %v956
        %v1023 = vmul.f32 %v670, %v944
        %v1024 = vmul.f32 %v672, %v948
        %v1025 = vmul.f32 %v743, %v952
        %v1026 = vmul.f32 %v745, %v956
        %v1028 = vlaneseq
        %v1029 = vshrl.u32 %v1028, 7
        %v1030 = vsub.s32 0, %v1029
        %v1031 = vrot.slane %v994, %v1030
        %v1032 = vlaneseq
        %v1033 = vshrl.u32 %v1032, 7
        %v1034 = vsub.s32 1, %v1033
        %v1035 = vrot.slane %v994, %v1034
        %v1036 = vlaneseq
        %v1037 = vshrl.u32 %v1036, 7
        %v1038 = vsub.s32 2, %v1037
        %v1039 = vrot.slane %v994, %v1038
        %v1040 = vlaneseq
        %v1041 = vshrl.u32 %v1040, 7
        %v1042 = vsub.s32 3, %v1041
        %v1043 = vrot.slane %v994, %v1042
        %v1048 = vadd.f32 %v995, %v1031
        %v1049 = vadd.f32 %v996, %v1035
        %v1050 = vadd.f32 %v997, %v1039
        %v1051 = vadd.f32 %v998, %v1043
        %v1052 = vadd.f32 %v999, %v1031
        %v1053 = vadd.f32 %v1000, %v1035
        %v1054 = vadd.f32 %v1001, %v1039
        %v1055 = vadd.f32 %v1002, %v1043
        %v1056 = vadd.f32 %v1003, %v1031
        %v1057 = vadd.f32 %v1004, %v1035
        %v1058 = vadd.f32 %v1005, %v1039
        %v1059 = vadd.f32 %v1006, %v1043
        %v1060 = vadd.f32 %v1007, %v1031
        %v1061 = vadd.f32 %v1008, %v1035
        %v1062 = vadd.f32 %v1009, %v1039
        %v1063 = vadd.f32 %v1010, %v1043
        %v1064 = vadd.f32 %v1011, %v1031
        %v1065 = vadd.f32 %v1012, %v1035
        %v1066 = vadd.f32 %v1013, %v1039
        %v1067 = vadd.f32 %v1014, %v1043
        %v1068 = vadd.f32 %v1015, %v1031
        %v1069 = vadd.f32 %v1016, %v1035
        %v1070 = vadd.f32 %v1017, %v1039
        %v1071 = vadd.f32 %v1018, %v1043
        %v1072 = vadd.f32 %v1019, %v1031
        %v1073 = vadd.f32 %v1020, %v1035
        %v1074 = vadd.f32 %v1021, %v1039
        %v1075 = vadd.f32 %v1022, %v1043
        %v1076 = vadd.f32 %v1023, %v1031
        %v1077 = vadd.f32 %v1024, %v1035
        %v1078 = vadd.f32 %v1025, %v1039
        %v1079 = vadd.f32 %v1026, %v1043
        %v1080 = vmax.f32 %v1048, 0.0
        %v1081 = vmax.f32 %v1049, 0.0
        %v1082 = vmax.f32 %v1050, 0.0
        %v1083 = vmax.f32 %v1051, 0.0
        %v1084 = vmax.f32 %v1052, 0.0
        %v1085 = vmax.f32 %v1053, 0.0
        %v1086 = vmax.f32 %v1054, 0.0
        %v1087 = vmax.f32 %v1055, 0.0
        %v1088 = vmax.f32 %v1056, 0.0
        %v1089 = vmax.f32 %v1057, 0.0
        %v1090 = vmax.f32 %v1058, 0.0
        %v1091 = vmax.f32 %v1059, 0.0
        %v1092 = vmax.f32 %v1060, 0.0
        %v1093 = vmax.f32 %v1061, 0.0
        %v1094 = vmax.f32 %v1062, 0.0
        %v1095 = vmax.f32 %v1063, 0.0
        %v1096 = vmax.f32 %v1064, 0.0
        %v1097 = vmax.f32 %v1065, 0.0
        %v1098 = vmax.f32 %v1066, 0.0
        %v1099 = vmax.f32 %v1067, 0.0
        %v1100 = vmax.f32 %v1068, 0.0
        %v1101 = vmax.f32 %v1069, 0.0
        %v1102 = vmax.f32 %v1070, 0.0
        %v1103 = vmax.f32 %v1071, 0.0
        %v1104 = vmax.f32 %v1072, 0.0
        %v1105 = vmax.f32 %v1073, 0.0
        %v1106 = vmax.f32 %v1074, 0.0
        %v1107 = vmax.f32 %v1075, 0.0
        %v1108 = vmax.f32 %v1076, 0.0
        %v1109 = vmax.f32 %v1077, 0.0
        %v1110 = vmax.f32 %v1078, 0.0
        %v1111 = vmax.f32 %v1079, 0.0
        %v1112 = vpack.c.bf16 %v1084, %v1080
        %v1113 = vpack.c.bf16 %v1085, %v1081
        %v1114 = vpack.c.bf16 %v1086, %v1082
        %v1115 = vpack.c.bf16 %v1087, %v1083
        %v1116 = vpack.c.bf16 %v1092, %v1088
        %v1117 = vpack.c.bf16 %v1093, %v1089
        %v1118 = vpack.c.bf16 %v1094, %v1090
        %v1119 = vpack.c.bf16 %v1095, %v1091
        %v1120 = vpack.c.bf16 %v1100, %v1096
        %v1121 = vpack.c.bf16 %v1101, %v1097
        %v1122 = vpack.c.bf16 %v1102, %v1098
        %v1123 = vpack.c.bf16 %v1103, %v1099
        %v1124 = vpack.c.bf16 %v1108, %v1104
        %v1125 = vpack.c.bf16 %v1109, %v1105
        %v1126 = vpack.c.bf16 %v1110, %v1106
        %v1127 = vpack.c.bf16 %v1111, %v1107
        %v1128 = vld [vmem:[%s339] sm:$0xff]
        %v1129 = vld [vmem:[%s339 + $0x8] sm:$0xff]
        %v1130 = vld [vmem:[%s339 + $0x10] sm:$0xff]
        %v1131 = vld [vmem:[%s339 + $0x18] sm:$0xff]
        %v1132 = vld [vmem:[%s339 + $0x20] sm:$0xff]
        %v1133 = vld [vmem:[%s339 + $0x28] sm:$0xff]
        %v1134 = vld [vmem:[%s339 + $0x30] sm:$0xff]
        %v1135 = vld [vmem:[%s339 + $0x38] sm:$0xff]
        %v1136 = vld [vmem:[%s339 + $0x40] sm:$0xff]
        %v1137 = vld [vmem:[%s339 + $0x48] sm:$0xff]
        %v1138 = vld [vmem:[%s339 + $0x50] sm:$0xff]
        %v1139 = vld [vmem:[%s339 + $0x58] sm:$0xff]
        %v1140 = vld [vmem:[%s339 + $0x60] sm:$0xff]
        %v1141 = vld [vmem:[%s339 + $0x68] sm:$0xff]
        %v1142 = vld [vmem:[%s339 + $0x70] sm:$0xff]
        %v1143 = vld [vmem:[%s339 + $0x78] sm:$0xff]
        %v1144 = vld [vmem:[%s339 + $0x80] sm:$0xff]
        %v1145 = vld [vmem:[%s339 + $0x88] sm:$0xff]
        %v1146 = vld [vmem:[%s339 + $0x90] sm:$0xff]
        %v1147 = vld [vmem:[%s339 + $0x98] sm:$0xff]
        %v1148 = vld [vmem:[%s339 + $0xa0] sm:$0xff]
        %v1149 = vld [vmem:[%s339 + $0xa8] sm:$0xff]
        %v1150 = vld [vmem:[%s339 + $0xb0] sm:$0xff]
        %v1151 = vld [vmem:[%s339 + $0xb8] sm:$0xff]
        %v1152 = vld [vmem:[%s339 + $0xc0] sm:$0xff]
        %v1153 = vld [vmem:[%s339 + $0xc8] sm:$0xff]
        %v1154 = vld [vmem:[%s339 + $0xd0] sm:$0xff]
        %v1155 = vld [vmem:[%s339 + $0xd8] sm:$0xff]
        %v1156 = vld [vmem:[%s339 + $0xe0] sm:$0xff]
        %v1157 = vld [vmem:[%s339 + $0xe8] sm:$0xff]
        %v1158 = vld [vmem:[%s339 + $0xf0] sm:$0xff]
        %v1159 = vld [vmem:[%s339 + $0xf8] sm:$0xff]
        %v1160 = vld [vmem:[%s339 + $0x100] sm:$0xff]
        %v1161 = vld [vmem:[%s339 + $0x108] sm:$0xff]
        %v1162 = vld [vmem:[%s339 + $0x110] sm:$0xff]
        %v1163 = vld [vmem:[%s339 + $0x118] sm:$0xff]
        %v1164 = vld [vmem:[%s339 + $0x120] sm:$0xff]
        %v1165 = vld [vmem:[%s339 + $0x128] sm:$0xff]
        %v1166 = vld [vmem:[%s339 + $0x130] sm:$0xff]
        %v1167 = vld [vmem:[%s339 + $0x138] sm:$0xff]
        %v1168 = vld [vmem:[%s339 + $0x140] sm:$0xff]
        %v1169 = vld [vmem:[%s339 + $0x148] sm:$0xff]
        %v1170 = vld [vmem:[%s339 + $0x150] sm:$0xff]
        %v1171 = vld [vmem:[%s339 + $0x158] sm:$0xff]
        %v1172 = vld [vmem:[%s339 + $0x160] sm:$0xff]
        %v1173 = vld [vmem:[%s339 + $0x168] sm:$0xff]
        %v1174 = vld [vmem:[%s339 + $0x170] sm:$0xff]
        %v1175 = vld [vmem:[%s339 + $0x178] sm:$0xff]
        %v1176 = vld [vmem:[%s339 + $0x180] sm:$0xff]
        %v1177 = vld [vmem:[%s339 + $0x188] sm:$0xff]
        %v1178 = vld [vmem:[%s339 + $0x190] sm:$0xff]
        %v1179 = vld [vmem:[%s339 + $0x198] sm:$0xff]
        %v1180 = vld [vmem:[%s339 + $0x1a0] sm:$0xff]
        %v1181 = vld [vmem:[%s339 + $0x1a8] sm:$0xff]
        %v1182 = vld [vmem:[%s339 + $0x1b0] sm:$0xff]
        %v1183 = vld [vmem:[%s339 + $0x1b8] sm:$0xff]
        %v1184 = vld [vmem:[%s339 + $0x1c0] sm:$0xff]
        %v1185 = vld [vmem:[%s339 + $0x1c8] sm:$0xff]
        %v1186 = vld [vmem:[%s339 + $0x1d0] sm:$0xff]
        %v1187 = vld [vmem:[%s339 + $0x1d8] sm:$0xff]
        %v1188 = vld [vmem:[%s339 + $0x1e0] sm:$0xff]
        %v1189 = vld [vmem:[%s339 + $0x1e8] sm:$0xff]
        %v1190 = vld [vmem:[%s339 + $0x1f0] sm:$0xff]
        %v1191 = vld [vmem:[%s339 + $0x1f8] sm:$0xff]
        %v1256 = vunpack.c.l.b16 %v1128
        %v1257 = vunpack.c.h.b16 %v1128
        %v1258 = vunpack.c.l.b16 %v1129
        %v1259 = vunpack.c.h.b16 %v1129
        %v1260 = vunpack.c.l.b16 %v1130
        %v1261 = vunpack.c.h.b16 %v1130
        %v1262 = vunpack.c.l.b16 %v1131
        %v1263 = vunpack.c.h.b16 %v1131
        %v1264 = vunpack.c.l.b16 %v1132
        %v1265 = vunpack.c.h.b16 %v1132
        %v1266 = vunpack.c.l.b16 %v1133
        %v1267 = vunpack.c.h.b16 %v1133
        %v1268 = vunpack.c.l.b16 %v1134
        %v1269 = vunpack.c.h.b16 %v1134
        %v1270 = vunpack.c.l.b16 %v1135
        %v1271 = vunpack.c.h.b16 %v1135
        %v1272 = vunpack.c.l.b16 %v1136
        %v1273 = vunpack.c.h.b16 %v1136
        %v1274 = vunpack.c.l.b16 %v1137
        %v1275 = vunpack.c.h.b16 %v1137
        %v1276 = vunpack.c.l.b16 %v1138
        %v1277 = vunpack.c.h.b16 %v1138
        %v1278 = vunpack.c.l.b16 %v1139
        %v1279 = vunpack.c.h.b16 %v1139
        %v1280 = vunpack.c.l.b16 %v1140
        %v1281 = vunpack.c.h.b16 %v1140
        %v1282 = vunpack.c.l.b16 %v1141
        %v1283 = vunpack.c.h.b16 %v1141
        %v1284 = vunpack.c.l.b16 %v1142
        %v1285 = vunpack.c.h.b16 %v1142
        %v1286 = vunpack.c.l.b16 %v1143
        %v1287 = vunpack.c.h.b16 %v1143
        %v1288 = vunpack.c.l.b16 %v1144
        %v1289 = vunpack.c.h.b16 %v1144
        %v1290 = vunpack.c.l.b16 %v1145
        %v1291 = vunpack.c.h.b16 %v1145
        %v1292 = vunpack.c.l.b16 %v1146
        %v1293 = vunpack.c.h.b16 %v1146
        %v1294 = vunpack.c.l.b16 %v1147
        %v1295 = vunpack.c.h.b16 %v1147
        %v1296 = vunpack.c.l.b16 %v1148
        %v1297 = vunpack.c.h.b16 %v1148
        %v1298 = vunpack.c.l.b16 %v1149
        %v1299 = vunpack.c.h.b16 %v1149
        %v1300 = vunpack.c.l.b16 %v1150
        %v1301 = vunpack.c.h.b16 %v1150
        %v1302 = vunpack.c.l.b16 %v1151
        %v1303 = vunpack.c.h.b16 %v1151
        %v1304 = vunpack.c.l.b16 %v1152
        %v1305 = vunpack.c.h.b16 %v1152
        %v1306 = vunpack.c.l.b16 %v1153
        %v1307 = vunpack.c.h.b16 %v1153
        %v1308 = vunpack.c.l.b16 %v1154
        %v1309 = vunpack.c.h.b16 %v1154
        %v1310 = vunpack.c.l.b16 %v1155
        %v1311 = vunpack.c.h.b16 %v1155
        %v1312 = vunpack.c.l.b16 %v1156
        %v1313 = vunpack.c.h.b16 %v1156
        %v1314 = vunpack.c.l.b16 %v1157
        %v1315 = vunpack.c.h.b16 %v1157
        %v1316 = vunpack.c.l.b16 %v1158
        %v1317 = vunpack.c.h.b16 %v1158
        %v1318 = vunpack.c.l.b16 %v1159
        %v1319 = vunpack.c.h.b16 %v1159
        %v1320 = vunpack.c.l.b16 %v1160
        %v1321 = vunpack.c.h.b16 %v1160
        %v1322 = vunpack.c.l.b16 %v1161
        %v1323 = vunpack.c.h.b16 %v1161
        %v1324 = vunpack.c.l.b16 %v1162
        %v1325 = vunpack.c.h.b16 %v1162
        %v1326 = vunpack.c.l.b16 %v1163
        %v1327 = vunpack.c.h.b16 %v1163
        %v1328 = vunpack.c.l.b16 %v1164
        %v1329 = vunpack.c.h.b16 %v1164
        %v1330 = vunpack.c.l.b16 %v1165
        %v1331 = vunpack.c.h.b16 %v1165
        %v1332 = vunpack.c.l.b16 %v1166
        %v1333 = vunpack.c.h.b16 %v1166
        %v1334 = vunpack.c.l.b16 %v1167
        %v1335 = vunpack.c.h.b16 %v1167
        %v1336 = vunpack.c.l.b16 %v1168
        %v1337 = vunpack.c.h.b16 %v1168
        %v1338 = vunpack.c.l.b16 %v1169
        %v1339 = vunpack.c.h.b16 %v1169
        %v1340 = vunpack.c.l.b16 %v1170
        %v1341 = vunpack.c.h.b16 %v1170
        %v1342 = vunpack.c.l.b16 %v1171
        %v1343 = vunpack.c.h.b16 %v1171
        %v1344 = vunpack.c.l.b16 %v1172
        %v1345 = vunpack.c.h.b16 %v1172
        %v1346 = vunpack.c.l.b16 %v1173
        %v1347 = vunpack.c.h.b16 %v1173
        %v1348 = vunpack.c.l.b16 %v1174
        %v1349 = vunpack.c.h.b16 %v1174
        %v1350 = vunpack.c.l.b16 %v1175
        %v1351 = vunpack.c.h.b16 %v1175
        %v1352 = vunpack.c.l.b16 %v1176
        %v1353 = vunpack.c.h.b16 %v1176
        %v1354 = vunpack.c.l.b16 %v1177
        %v1355 = vunpack.c.h.b16 %v1177
        %v1356 = vunpack.c.l.b16 %v1178
        %v1357 = vunpack.c.h.b16 %v1178
        %v1358 = vunpack.c.l.b16 %v1179
        %v1359 = vunpack.c.h.b16 %v1179
        %v1360 = vunpack.c.l.b16 %v1180
        %v1361 = vunpack.c.h.b16 %v1180
        %v1362 = vunpack.c.l.b16 %v1181
        %v1363 = vunpack.c.h.b16 %v1181
        %v1364 = vunpack.c.l.b16 %v1182
        %v1365 = vunpack.c.h.b16 %v1182
        %v1366 = vunpack.c.l.b16 %v1183
        %v1367 = vunpack.c.h.b16 %v1183
        %v1368 = vunpack.c.l.b16 %v1184
        %v1369 = vunpack.c.h.b16 %v1184
        %v1370 = vunpack.c.l.b16 %v1185
        %v1371 = vunpack.c.h.b16 %v1185
        %v1372 = vunpack.c.l.b16 %v1186
        %v1373 = vunpack.c.h.b16 %v1186
        %v1374 = vunpack.c.l.b16 %v1187
        %v1375 = vunpack.c.h.b16 %v1187
        %v1376 = vunpack.c.l.b16 %v1188
        %v1377 = vunpack.c.h.b16 %v1188
        %v1378 = vunpack.c.l.b16 %v1189
        %v1379 = vunpack.c.h.b16 %v1189
        %v1380 = vunpack.c.l.b16 %v1190
        %v1381 = vunpack.c.h.b16 %v1190
        %v1382 = vunpack.c.l.b16 %v1191
        %v1383 = vunpack.c.h.b16 %v1191
        %v1384 = vpack.c.b16 %v1258, %v1256
        %v1385 = vpack.c.b16 %v1259, %v1257
        %v1386 = vpack.c.b16 %v1262, %v1260
        %v1387 = vpack.c.b16 %v1263, %v1261
        %v1388 = vpack.c.b16 %v1266, %v1264
        %v1389 = vpack.c.b16 %v1267, %v1265
        %v1390 = vpack.c.b16 %v1270, %v1268
        %v1391 = vpack.c.b16 %v1271, %v1269
        %v1392 = vpack.c.b16 %v1274, %v1272
        %v1393 = vpack.c.b16 %v1275, %v1273
        %v1394 = vpack.c.b16 %v1278, %v1276
        %v1395 = vpack.c.b16 %v1279, %v1277
        %v1396 = vpack.c.b16 %v1282, %v1280
        %v1397 = vpack.c.b16 %v1283, %v1281
        %v1398 = vpack.c.b16 %v1286, %v1284
        %v1399 = vpack.c.b16 %v1287, %v1285
        %v1400 = vpack.c.b16 %v1290, %v1288
        %v1401 = vpack.c.b16 %v1291, %v1289
        %v1402 = vpack.c.b16 %v1294, %v1292
        %v1403 = vpack.c.b16 %v1295, %v1293
        %v1404 = vpack.c.b16 %v1298, %v1296
        %v1405 = vpack.c.b16 %v1299, %v1297
        %v1406 = vpack.c.b16 %v1302, %v1300
        %v1407 = vpack.c.b16 %v1303, %v1301
        %v1408 = vpack.c.b16 %v1306, %v1304
        %v1409 = vpack.c.b16 %v1307, %v1305
        %v1410 = vpack.c.b16 %v1310, %v1308
        %v1411 = vpack.c.b16 %v1311, %v1309
        %v1412 = vpack.c.b16 %v1314, %v1312
        %v1413 = vpack.c.b16 %v1315, %v1313
        %v1414 = vpack.c.b16 %v1318, %v1316
        %v1415 = vpack.c.b16 %v1319, %v1317
        %v1416 = vpack.c.b16 %v1322, %v1320
        %v1417 = vpack.c.b16 %v1323, %v1321
        %v1418 = vpack.c.b16 %v1326, %v1324
        %v1419 = vpack.c.b16 %v1327, %v1325
        %v1420 = vpack.c.b16 %v1330, %v1328
        %v1421 = vpack.c.b16 %v1331, %v1329
        %v1422 = vpack.c.b16 %v1334, %v1332
        %v1423 = vpack.c.b16 %v1335, %v1333
        %v1424 = vpack.c.b16 %v1338, %v1336
        %v1425 = vpack.c.b16 %v1339, %v1337
        %v1426 = vpack.c.b16 %v1342, %v1340
        %v1427 = vpack.c.b16 %v1343, %v1341
        %v1428 = vpack.c.b16 %v1346, %v1344
        %v1429 = vpack.c.b16 %v1347, %v1345
        %v1430 = vpack.c.b16 %v1350, %v1348
        %v1431 = vpack.c.b16 %v1351, %v1349
        %v1432 = vpack.c.b16 %v1354, %v1352
        %v1433 = vpack.c.b16 %v1355, %v1353
        %v1434 = vpack.c.b16 %v1358, %v1356
        %v1435 = vpack.c.b16 %v1359, %v1357
        %v1436 = vpack.c.b16 %v1362, %v1360
        %v1437 = vpack.c.b16 %v1363, %v1361
        %v1438 = vpack.c.b16 %v1366, %v1364
        %v1439 = vpack.c.b16 %v1367, %v1365
        %v1440 = vpack.c.b16 %v1370, %v1368
        %v1441 = vpack.c.b16 %v1371, %v1369
        %v1442 = vpack.c.b16 %v1374, %v1372
        %v1443 = vpack.c.b16 %v1375, %v1373
        %v1444 = vpack.c.b16 %v1378, %v1376
        %v1445 = vpack.c.b16 %v1379, %v1377
        %v1446 = vpack.c.b16 %v1382, %v1380
        %v1447 = vpack.c.b16 %v1383, %v1381
        %1512 = vmatprep.subr.bf16.mxu0 %v1399
        %1513 = vmatpush1.bf16.msra.mxu0 %v1398
        %1514 = vmatprep.subr.bf16.mxu0 %v1397
        %1515 = vmatpush1.bf16.msra.mxu0 %v1396
        %1516 = vmatprep.subr.bf16.mxu0 %v1395
        %1517 = vmatpush1.bf16.msra.mxu0 %v1394
        %1518 = vmatprep.subr.bf16.mxu0 %v1393
        %1519 = vmatpush1.bf16.msra.mxu0 %v1392
        %1520 = vmatprep.subr.bf16.mxu0 %v1391
        %1521 = vmatpush1.bf16.msra.mxu0 %v1390
        %1522 = vmatprep.subr.bf16.mxu0 %v1389
        %1523 = vmatpush1.bf16.msra.mxu0 %v1388
        %1524 = vmatprep.subr.bf16.mxu0 %v1387
        %1525 = vmatpush1.bf16.msra.mxu0 %v1386
        %1526 = vmatprep.subr.bf16.mxu0 %v1385
        %1527 = vmatpush1.bf16.msra.mxu0 %v1384
        %1528 = vmatprep.subr.bf16.mxu0 %v1415
        %1529 = vmatpush2.bf16.msra.mxu0 %v1414
        %1530 = vmatprep.subr.bf16.mxu0 %v1413
        %1531 = vmatpush2.bf16.msra.mxu0 %v1412
        %1532 = vmatprep.subr.bf16.mxu0 %v1411
        %1533 = vmatpush2.bf16.msra.mxu0 %v1410
        %1534 = vmatprep.subr.bf16.mxu0 %v1409
        %1535 = vmatpush2.bf16.msra.mxu0 %v1408
        %1536 = vmatprep.subr.bf16.mxu0 %v1407
        %1537 = vmatpush2.bf16.msra.mxu0 %v1406
        %1538 = vmatprep.subr.bf16.mxu0 %v1405
        %1539 = vmatpush2.bf16.msra.mxu0 %v1404
        %1540 = vmatprep.subr.bf16.mxu0 %v1403
        %1541 = vmatpush2.bf16.msra.mxu0 %v1402
        %1542 = vmatprep.subr.bf16.mxu0 %v1401
        %1543 = vmatpush2.bf16.msra.mxu0 %v1400
        %1544 = vmatprep.mubr.bf16.mxu0 %v1113
        %1545 = vmatmul.mubr.bf16.gmra.mxu0 %v1112
        %v1546 = vpop.f32.mrf.mxu0
        %v1547 = vadd.f32 0.0, %v1546
        %v1548 = vpop.f32.mrf.mxu0
        %v1549 = vadd.f32 0.0, %v1548
        %v1550 = vpop.f32.mrf.mxu0
        %v1551 = vadd.f32 0.0, %v1550
        %v1552 = vpop.f32.mrf.mxu0
        %v1553 = vadd.f32 0.0, %v1552
        %1554 = vmatprep.mubr.bf16.mxu0 %v1117
        %1555 = vmatmul.mubr.bf16.gmra.mxu0 %v1116
        %v1556 = vpop.f32.mrf.mxu0
        %v1557 = vadd.f32 0.0, %v1556
        %v1558 = vpop.f32.mrf.mxu0
        %v1559 = vadd.f32 0.0, %v1558
        %v1560 = vpop.f32.mrf.mxu0
        %v1561 = vadd.f32 0.0, %v1560
        %v1562 = vpop.f32.mrf.mxu0
        %v1563 = vadd.f32 0.0, %v1562
        %1564 = vmatprep.mubr.bf16.mxu0 %v1121
        %1565 = vmatmul.mubr.bf16.gmra.mxu0 %v1120
        %v1566 = vpop.f32.mrf.mxu0
        %v1567 = vadd.f32 0.0, %v1566
        %v1568 = vpop.f32.mrf.mxu0
        %v1569 = vadd.f32 0.0, %v1568
        %v1570 = vpop.f32.mrf.mxu0
        %v1571 = vadd.f32 0.0, %v1570
        %v1572 = vpop.f32.mrf.mxu0
        %v1573 = vadd.f32 0.0, %v1572
        %1574 = vmatprep.mubr.bf16.mxu0 %v1125
        %1575 = vmatmul.mubr.bf16.gmra.mxu0 %v1124
        %v1576 = vpop.f32.mrf.mxu0
        %v1577 = vadd.f32 0.0, %v1576
        %v1578 = vpop.f32.mrf.mxu0
        %v1579 = vadd.f32 0.0, %v1578
        %v1580 = vpop.f32.mrf.mxu0
        %v1581 = vadd.f32 0.0, %v1580
        %v1582 = vpop.f32.mrf.mxu0
        %v1583 = vadd.f32 0.0, %v1582
        %1584 = vdwg.mxu0
        %1585 = vmatprep.subr.bf16.mxu0 %v1431
        %1586 = vmatpush1.bf16.msra.mxu0 %v1430
        %1587 = vmatprep.subr.bf16.mxu0 %v1429
        %1588 = vmatpush1.bf16.msra.mxu0 %v1428
        %1589 = vmatprep.subr.bf16.mxu0 %v1427
        %1590 = vmatpush1.bf16.msra.mxu0 %v1426
        %1591 = vmatprep.subr.bf16.mxu0 %v1425
        %1592 = vmatpush1.bf16.msra.mxu0 %v1424
        %1593 = vmatprep.subr.bf16.mxu0 %v1423
        %1594 = vmatpush1.bf16.msra.mxu0 %v1422
        %1595 = vmatprep.subr.bf16.mxu0 %v1421
        %1596 = vmatpush1.bf16.msra.mxu0 %v1420
        %1597 = vmatprep.subr.bf16.mxu0 %v1419
        %1598 = vmatpush1.bf16.msra.mxu0 %v1418
        %1599 = vmatprep.subr.bf16.mxu0 %v1417
        %1600 = vmatpush1.bf16.msra.mxu0 %v1416
        %1601 = vmatprep.subr.bf16.mxu0 %v1447
        %1602 = vmatpush2.bf16.msra.mxu0 %v1446
        %1603 = vmatprep.subr.bf16.mxu0 %v1445
        %1604 = vmatpush2.bf16.msra.mxu0 %v1444
        %1605 = vmatprep.subr.bf16.mxu0 %v1443
        %1606 = vmatpush2.bf16.msra.mxu0 %v1442
        %1607 = vmatprep.subr.bf16.mxu0 %v1441
        %1608 = vmatpush2.bf16.msra.mxu0 %v1440
        %1609 = vmatprep.subr.bf16.mxu0 %v1439
        %1610 = vmatpush2.bf16.msra.mxu0 %v1438
        %1611 = vmatprep.subr.bf16.mxu0 %v1437
        %1612 = vmatpush2.bf16.msra.mxu0 %v1436
        %1613 = vmatprep.subr.bf16.mxu0 %v1435
        %1614 = vmatpush2.bf16.msra.mxu0 %v1434
        %1615 = vmatprep.subr.bf16.mxu0 %v1433
        %1616 = vmatpush2.bf16.msra.mxu0 %v1432
        %1617 = vmatprep.mubr.bf16.mxu0 %v1115
        %1618 = vmatmul.mubr.bf16.gmra.mxu0 %v1114
        %v1619 = vpop.f32.mrf.mxu0
        %v1620 = vadd.f32 %v1547, %v1619
        %v1621 = vpop.f32.mrf.mxu0
        %v1622 = vadd.f32 %v1549, %v1621
        %v1623 = vpop.f32.mrf.mxu0
        %v1624 = vadd.f32 %v1551, %v1623
        %v1625 = vpop.f32.mrf.mxu0
        %v1626 = vadd.f32 %v1553, %v1625
        %1627 = vmatprep.mubr.bf16.mxu0 %v1119
        %1628 = vmatmul.mubr.bf16.gmra.mxu0 %v1118
        %v1629 = vpop.f32.mrf.mxu0
        %v1630 = vadd.f32 %v1557, %v1629
        %v1631 = vpop.f32.mrf.mxu0
        %v1632 = vadd.f32 %v1559, %v1631
        %v1633 = vpop.f32.mrf.mxu0
        %v1634 = vadd.f32 %v1561, %v1633
        %v1635 = vpop.f32.mrf.mxu0
        %v1636 = vadd.f32 %v1563, %v1635
        %1637 = vmatprep.mubr.bf16.mxu0 %v1123
        %1638 = vmatmul.mubr.bf16.gmra.mxu0 %v1122
        %v1639 = vpop.f32.mrf.mxu0
        %v1640 = vadd.f32 %v1567, %v1639
        %v1641 = vpop.f32.mrf.mxu0
        %v1642 = vadd.f32 %v1569, %v1641
        %v1643 = vpop.f32.mrf.mxu0
        %v1644 = vadd.f32 %v1571, %v1643
        %v1645 = vpop.f32.mrf.mxu0
        %v1646 = vadd.f32 %v1573, %v1645
        %1647 = vmatprep.mubr.bf16.mxu0 %v1127
        %1648 = vmatmul.mubr.bf16.gmra.mxu0 %v1126
        %v1649 = vpop.f32.mrf.mxu0
        %v1650 = vadd.f32 %v1577, %v1649
        %v1651 = vpop.f32.mrf.mxu0
        %v1652 = vadd.f32 %v1579, %v1651
        %v1653 = vpop.f32.mrf.mxu0
        %v1654 = vadd.f32 %v1581, %v1653
        %v1655 = vpop.f32.mrf.mxu0
        %v1656 = vadd.f32 %v1583, %v1655
        %1657 = vdwg.mxu0
        %v1658 = vadd.f32 %v1620, %v1624
        %v1659 = vadd.f32 %v1658, %v1630
        %v1660 = vadd.f32 %v1659, %v1634
        %v1661 = vadd.f32 %v1660, %v1640
        %v1662 = vadd.f32 %v1661, %v1644
        %v1663 = vadd.f32 %v1662, %v1650
        %v1664 = vadd.f32 %v1663, %v1654
        %v1665 = vrot.slane %v1664, 4
        %v1666 = vadd.f32 %v1664, %v1665
        %v1667 = vrot.slane %v1666, 2
        %v1668 = vadd.f32 %v1666, %v1667
        %v1669 = vrot.slane %v1668, 1
        %v1670 = vadd.f32 %v1668, %v1669
        %v1671 = vadd.f32 %v1622, %v1626
        %v1672 = vadd.f32 %v1671, %v1632
        %v1673 = vadd.f32 %v1672, %v1636
        %v1674 = vadd.f32 %v1673, %v1642
        %v1675 = vadd.f32 %v1674, %v1646
        %v1676 = vadd.f32 %v1675, %v1652
        %v1677 = vadd.f32 %v1676, %v1656
        %v1678 = vrot.slane %v1677, 4
        %v1679 = vadd.f32 %v1677, %v1678
        %v1680 = vrot.slane %v1679, 2
        %v1681 = vadd.f32 %v1679, %v1680
        %v1682 = vrot.slane %v1681, 1
        %v1683 = vadd.f32 %v1681, %v1682
        %v1684 = vmul.f32 %v1670, %v799
        %v1685 = vmul.f32 %v1683, %v799
        %v1686 = vmul.f32 %v1620, %v1620
        %v1687 = vmul.f32 %v1622, %v1622
        %v1688 = vmul.f32 %v1624, %v1624
        %v1689 = vmul.f32 %v1626, %v1626
        %v1690 = vmul.f32 %v1630, %v1630
        %v1691 = vmul.f32 %v1632, %v1632
        %v1692 = vmul.f32 %v1634, %v1634
        %v1693 = vmul.f32 %v1636, %v1636
        %v1694 = vmul.f32 %v1640, %v1640
        %v1695 = vmul.f32 %v1642, %v1642
        %v1696 = vmul.f32 %v1644, %v1644
        %v1697 = vmul.f32 %v1646, %v1646
        %v1698 = vmul.f32 %v1650, %v1650
        %v1699 = vmul.f32 %v1652, %v1652
        %v1700 = vmul.f32 %v1654, %v1654
        %v1701 = vmul.f32 %v1656, %v1656
        %v1702 = vadd.f32 %v1686, %v1688
        %v1703 = vadd.f32 %v1702, %v1690
        %v1704 = vadd.f32 %v1703, %v1692
        %v1705 = vadd.f32 %v1704, %v1694
        %v1706 = vadd.f32 %v1705, %v1696
        %v1707 = vadd.f32 %v1706, %v1698
        %v1708 = vadd.f32 %v1707, %v1700
        %v1709 = vrot.slane %v1708, 4
        %v1710 = vadd.f32 %v1708, %v1709
        %v1711 = vrot.slane %v1710, 2
        %v1712 = vadd.f32 %v1710, %v1711
        %v1713 = vrot.slane %v1712, 1
        %v1714 = vadd.f32 %v1712, %v1713
        %v1715 = vadd.f32 %v1687, %v1689
        %v1716 = vadd.f32 %v1715, %v1691
        %v1717 = vadd.f32 %v1716, %v1693
        %v1718 = vadd.f32 %v1717, %v1695
        %v1719 = vadd.f32 %v1718, %v1697
        %v1720 = vadd.f32 %v1719, %v1699
        %v1721 = vadd.f32 %v1720, %v1701
        %v1722 = vrot.slane %v1721, 4
        %v1723 = vadd.f32 %v1721, %v1722
        %v1724 = vrot.slane %v1723, 2
        %v1725 = vadd.f32 %v1723, %v1724
        %v1726 = vrot.slane %v1725, 1
        %v1727 = vadd.f32 %v1725, %v1726
        %v1728 = vmul.f32 %v1714, %v799
        %v1729 = vmul.f32 %v1727, %v799
        %v1730 = vmul.f32 %v1684, %v1684
        %v1731 = vmul.f32 %v1685, %v1685
        %v1732 = vsub.f32 %v1728, %v1730
        %v1733 = vsub.f32 %v1729, %v1731
        %v1734 = vld [vmem:[%s392] sm:$0x3]
        %v1735 = vadd.f32 %v1732, 1e-05
        %v1736 = vadd.f32 %v1733, 1e-05
        %v1737 = vrsqrt.pop %v1735
        %v1738 = vrsqrt.pop %v1736
        %v1741 = vcombine.low %v1737, %v1738
        %v1743 = vunpack.c.l.s4 1966171168
        %v1744 = vunpack.c.0.s8 %v1743
        %v1745 = vlaneseq
        %v1746 = vshrl.u32 %v1745, 7
        %v1747 = vsub.s32 %v1744, %v1746
        %v1748 = vrot.slane %v1741, %v1747
        %v1750 = vunpack.c.l.s4 1966171168
        %v1751 = vunpack.c.0.s8 %v1750
        %v1752 = vlaneseq
        %v1753 = vshrl.u32 %v1752, 7
        %v1754 = vsub.s32 %v1751, %v1753
        %v1755 = vrot.slane %v1748, %v1754
        %v1757 = vmul.f32 %v1734, %v1755
        %v1758 = vld [vmem:[%s348] sm:$0x3]
        %v1760 = vlaneseq
        %v1761 = vshrl.u32 %v1760, 7
        %v1762 = vsub.s32 0, %v1761
        %v1763 = vrot.slane %v1757, %v1762
        %v1764 = vlaneseq
        %v1765 = vshrl.u32 %v1764, 7
        %v1766 = vsub.s32 1, %v1765
        %v1767 = vrot.slane %v1757, %v1766
        %v1770 = vmul.f32 %v1684, %v1763
        %v1771 = vmul.f32 %v1685, %v1767
        %v1774 = vcombine.low %v1770, %v1771
        %v1776 = vunpack.c.l.s4 1966171168
        %v1777 = vunpack.c.0.s8 %v1776
        %v1778 = vlaneseq
        %v1779 = vshrl.u32 %v1778, 7
        %v1780 = vsub.s32 %v1777, %v1779
        %v1781 = vrot.slane %v1774, %v1780
        %v1783 = vunpack.c.l.s4 1966171168
        %v1784 = vunpack.c.0.s8 %v1783
        %v1785 = vlaneseq
        %v1786 = vshrl.u32 %v1785, 7
        %v1787 = vsub.s32 %v1784, %v1786
        %v1788 = vrot.slane %v1781, %v1787
        %v1790 = vsub.f32 %v1758, %v1788
        %v1791 = vmul.f32 %v1620, %v1763
        %v1792 = vmul.f32 %v1622, %v1767
        %v1793 = vmul.f32 %v1624, %v1763
        %v1794 = vmul.f32 %v1626, %v1767
        %v1795 = vmul.f32 %v1630, %v1763
        %v1796 = vmul.f32 %v1632, %v1767
        %v1797 = vmul.f32 %v1634, %v1763
        %v1798 = vmul.f32 %v1636, %v1767
        %v1799 = vmul.f32 %v1640, %v1763
        %v1800 = vmul.f32 %v1642, %v1767
        %v1801 = vmul.f32 %v1644, %v1763
        %v1802 = vmul.f32 %v1646, %v1767
        %v1803 = vmul.f32 %v1650, %v1763
        %v1804 = vmul.f32 %v1652, %v1767
        %v1805 = vmul.f32 %v1654, %v1763
        %v1806 = vmul.f32 %v1656, %v1767
        %v1808 = vlaneseq
        %v1809 = vshrl.u32 %v1808, 7
        %v1810 = vsub.s32 0, %v1809
        %v1811 = vrot.slane %v1790, %v1810
        %v1812 = vlaneseq
        %v1813 = vshrl.u32 %v1812, 7
        %v1814 = vsub.s32 1, %v1813
        %v1815 = vrot.slane %v1790, %v1814
        %v1818 = vadd.f32 %v1791, %v1811
        %v1819 = vadd.f32 %v1792, %v1815
        %v1820 = vadd.f32 %v1793, %v1811
        %v1821 = vadd.f32 %v1794, %v1815
        %v1822 = vadd.f32 %v1795, %v1811
        %v1823 = vadd.f32 %v1796, %v1815
        %v1824 = vadd.f32 %v1797, %v1811
        %v1825 = vadd.f32 %v1798, %v1815
        %v1826 = vadd.f32 %v1799, %v1811
        %v1827 = vadd.f32 %v1800, %v1815
        %v1828 = vadd.f32 %v1801, %v1811
        %v1829 = vadd.f32 %v1802, %v1815
        %v1830 = vadd.f32 %v1803, %v1811
        %v1831 = vadd.f32 %v1804, %v1815
        %v1832 = vadd.f32 %v1805, %v1811
        %v1833 = vadd.f32 %v1806, %v1815
        %1834 = vst [vmem:[%s387] sm:$0xff] %v1818
        %1835 = vst [vmem:[%s387 + $0x8] sm:$0xff] %v1819
        %1836 = vst [vmem:[%s387 + $0x10] sm:$0xff] %v1820
        %1837 = vst [vmem:[%s387 + $0x18] sm:$0xff] %v1821
        %1838 = vst [vmem:[%s387 + $0x20] sm:$0xff] %v1822
        %1839 = vst [vmem:[%s387 + $0x28] sm:$0xff] %v1823
        %1840 = vst [vmem:[%s387 + $0x30] sm:$0xff] %v1824
        %1841 = vst [vmem:[%s387 + $0x38] sm:$0xff] %v1825
        %1842 = vst [vmem:[%s387 + $0x40] sm:$0xff] %v1826
        %1843 = vst [vmem:[%s387 + $0x48] sm:$0xff] %v1827
        %1844 = vst [vmem:[%s387 + $0x50] sm:$0xff] %v1828
        %1845 = vst [vmem:[%s387 + $0x58] sm:$0xff] %v1829
        %1846 = vst [vmem:[%s387 + $0x60] sm:$0xff] %v1830
        %1847 = vst [vmem:[%s387 + $0x68] sm:$0xff] %v1831
        %1848 = vst [vmem:[%s387 + $0x70] sm:$0xff] %v1832
        %1849 = vst [vmem:[%s387 + $0x78] sm:$0xff] %v1833
        %s1850 = sand.u32 %s196, 1
        %s1851 = scalar_lea.sflag [#allocation4], %s1850
        %s1852 = sand.u32 %s196, 1
        %s1853 = smul.addr %s1852, 128
        %s1854 = scalar_lea.vmem [#allocation11], %s1853
        // Predicated region
        $region69: #{tpu_custom_call.1} parent=47 // pred_check
          %p1855 = pneg %p206
        $region70: #{tpu_custom_call.1} parent=47 // pred_check_branch
          %1857 = sbr.rel (%p1855) target = $region72
        $region71: #{tpu_custom_call.1} parent=47 // pred_region
          %s1858 = smul.u32 2, %s26
          %s1860 = ssub.s32 2048, 2048
          %1861 = vsyncadd %s1851, %s1860
          %s1862 = smul.addr %s1858, 128
          %s1863 = scalar_lea.hbm %s7, %s1862
          %s1864 = sshll.u32 %s1854, 4
          %s1865 = int_to_ptr.vmem [resolvable:$true] %s1864
          %1870 = dma.vmem_to_hbm [thread:$0]  %s1865, 2048, %s1863, %s1851, 256, 512, 16
        $region72: #{tpu_custom_call.1} parent=47 // pred_fallthru
          _
      $region48: #{tpu_custom_call.1} parent=5 // pred_fallthru
        _
      %p1871 = scmp.le.s32.totalorder 2, %s21
      // Predicated region
      $region73: #{tpu_custom_call.1} parent=5 // pred_check
        %p1872 = pneg %p1871
      $region74: #{tpu_custom_call.1} parent=5 // pred_check_branch
        %1874 = sbr.rel (%p1872) target = $region76
      $region75: #{tpu_custom_call.1} parent=5 // pred_region
        %s1875 = ssub.s32 %s21, 2
        // Predicated region
        $region77: #{tpu_custom_call.1} parent=75 // pred_check
          %p1876 = pneg %p212
        $region78: #{tpu_custom_call.1} parent=75 // pred_check_branch
          %1878 = sbr.rel (%p1876) target = $region80
        $region79: #{tpu_custom_call.1} parent=75 // pred_region
          %s1879 = sand.u32 %s197, 1
          %s1880 = scalar_lea.sflag [#allocation4], %s1879
          %s1881 = sand.u32 %s197, 1
          %s1882 = smul.addr %s1881, 128
          %s1883 = scalar_lea.vmem [#allocation11], %s1882
          %1884 = dma.done %s1880, 2048
        $region80: #{tpu_custom_call.1} parent=75 // pred_fallthru
          _
      $region76: #{tpu_custom_call.1} parent=5 // pred_fallthru
        _
    $region6: #{tpu_custom_call.1} parent=1 // loop_footer
      %s25 = sadd.s32 1, %s21
    $region7: #{tpu_custom_call.1} parent=1 // loop_footer_branch
      %20 = sbr.rel target = $region3
    $region8: #{tpu_custom_call.1} parent=1 // loop_exit
      _
    %1885 = vsyncpa [#allocation3], 1
    %s1886 = scalar_lea.sflag [#allocation3], 1
    %1887 = vsyncpa %s1886, 1
    %1888 = vsyncpa [#allocation6], 1
    %1889 = vsyncpa [#allocation9], 1
    %s1890 = scalar_lea.sflag [#allocation9], 1
    %1891 = vsyncpa %s1890, 1
    %1892 = vsyncpa [#allocation4], 1
    %s1893 = scalar_lea.sflag [#allocation4], 1
    %1894 = vsyncpa %s1893, 1

</llo_original>
